<compile_context>
chip_gen: v6e
topology: v6e:2x2x1
jax: 0.10.0
libtpu: 0.0.40
codegen_flags: <defaults>
</compile_context>

<pallas_src>
import jax
import jax.numpy as jnp
from jax.experimental import pallas as pl
from jax.experimental.pallas import tpu as pltpu

B, T, EMB, HEADS = 2, 8, 32, 4
HEAD_DIM = EMB // HEADS
SCALE = 1.0 / (EMB ** 0.5)   # PyTorch module scales by sqrt(emb), not sqrt(head_dim)


def mhsa_kernel(x_ref, wqkv_ref, wu_ref, bqkv_ref, bu_ref, o_ref):
    # x_ref: (B*T, EMB) -- all batches folded into the sublane axis.
    x = x_ref[...]

    # Fused Q|K|V projection: one MXU matmul + one broadcast bias add.
    qkv = jnp.dot(x, wqkv_ref[...], preferred_element_type=jnp.float32) + bqkv_ref[...]

    wu = wu_ref[...]          # (EMB, EMB); sliced per head along sublanes below
    bu = bu_ref[...]          # (1, EMB)

    # Static unrolled loops over batch (8-aligned sublane row slices) and heads.
    for b in range(B):
        r0 = b * T
        qkv_b = qkv[r0:r0 + T, :]                         # (T, 3*EMB)
        acc = jnp.broadcast_to(bu, (T, EMB))              # unify bias seeds accumulator

        for h in range(HEADS):
            c0 = h * HEAD_DIM
            q_h = qkv_b[:, c0:c0 + HEAD_DIM]                          # (T, HD)
            k_h = qkv_b[:, EMB + c0:EMB + c0 + HEAD_DIM]              # (T, HD)
            v_h = qkv_b[:, 2 * EMB + c0:2 * EMB + c0 + HEAD_DIM]      # (T, HD)

            s = jnp.dot(q_h, k_h.T, preferred_element_type=jnp.float32) * SCALE  # (T, T)
            # TODO(synk): optional `mask` argument of the PyTorch module is not
            # plumbed through (mask=None path only).
            s = s - jnp.max(s, axis=-1, keepdims=True)
            p = jnp.exp(s)
            p = p * pl.reciprocal(jnp.sum(p, axis=-1, keepdims=True), approx=True)

            y_h = jnp.dot(p, v_h, preferred_element_type=jnp.float32)            # (T, HD)
            # Fold the "unify" projection into the head loop (no concat needed).
            acc = acc + jnp.dot(y_h, wu[c0:c0 + HEAD_DIM, :],
                                preferred_element_type=jnp.float32)

        # Sublane-aligned store of this batch's rows.
        o_ref[pl.ds(r0, T), :] = acc.astype(o_ref.dtype)


def mhsa_forward(x, fused_params):
    wqkv, bqkv, wu, bu = fused_params
    x2d = x.reshape(B * T, EMB)
    out = pl.pallas_call(
        mhsa_kernel,
        out_shape=jax.ShapeDtypeStruct((B * T, EMB), jnp.float32),
        grid_spec=pltpu.PrefetchScalarGridSpec(
            num_scalar_prefetch=0,
            grid=(1,),                                          # single invocation
            in_specs=[
                pl.BlockSpec((B * T, EMB), lambda i: (0, 0)),   # x (all rows at once)
                pl.BlockSpec((EMB, 3 * EMB), lambda i: (0, 0)), # fused Wq|Wk|Wv
                pl.BlockSpec((EMB, EMB), lambda i: (0, 0)),     # Wu
                pl.BlockSpec((1, 3 * EMB), lambda i: (0, 0)),   # fused bq|bk|bv
                pl.BlockSpec((1, EMB), lambda i: (0, 0)),       # bu
            ],
            out_specs=pl.BlockSpec((B * T, EMB), lambda i: (0, 0)),
        ),
        compiler_params=pltpu.CompilerParams(dimension_semantics=("arbitrary",)),
    )(x2d, wqkv, wu, bqkv, bu)
    return out.reshape(B, T, EMB)


def fuse_params(params):
    # One-time (outside hot path): concat Q/K/V weights and biases.
    wq, bq, wk, bk, wv, bv, wu, bu = params
    wqkv = jnp.concatenate([wq, wk, wv], axis=1)   # (EMB, 3*EMB)
    bqkv = jnp.concatenate([bq, bk, bv], axis=1)   # (1, 3*EMB)
    return wqkv, bqkv, wu, bu


def reference_forward(x, params):
    wq, bq, wk, bk, wv, bv, wu, bu = params
    q = x @ wq + bq
    k = x @ wk + bk
    v = x @ wv + bv
    def split(a):  # (B, T, EMB) -> (B, H, T, K)
        return a.reshape(B, T, HEADS, HEAD_DIM).transpose(0, 2, 1, 3)
    q, k, v = split(q), split(k), split(v)
    w = jnp.einsum("bhtd,bhsd->bhts", q, k) * SCALE
    w = jax.nn.softmax(w, axis=-1)
    y = jnp.einsum("bhts,bhsd->bhtd", w, v)
    y = y.transpose(0, 2, 1, 3).reshape(B, T, EMB)
    return y @ wu + bu


def init_params(key):
    ks = jax.random.split(key, 8)
    bound = 1.0 / (EMB ** 0.5)
    def lin(kw, kb):
        # torch.nn.Linear weight is (out, in); we store the transpose (in, out).
        w = jax.random.uniform(kw, (EMB, EMB), jnp.float32, -bound, bound)
        b = jax.random.uniform(kb, (1, EMB), jnp.float32, -bound, bound)
        return w, b
    wq, bq = lin(ks[0], ks[1])
    wk, bk = lin(ks[2], ks[3])
    wv, bv = lin(ks[4], ks[5])
    wu, bu = lin(ks[6], ks[7])
    return (wq, bq, wk, bk, wv, bv, wu, bu)


if __name__ == "__main__":
    key = jax.random.PRNGKey(0)
    kx, kp = jax.random.split(key)
    x = jax.random.normal(kx, (B, T, EMB), jnp.float32)
    params = init_params(kp)
    fused = fuse_params(params)

    out = mhsa_forward(x, fused)
    out = jax.block_until_ready(out)

    ref = reference_forward(x, params)
    assert out.shape == (B, T, EMB)
    # approx=True reciprocal (EUP vrcp) has ~1e-4 relative error -> allow 2e-3.
    assert jnp.allclose(out, ref, atol=2e-3, rtol=2e-3), "mismatch vs pure-JAX reference"

    print("KERNEL_OK")
</pallas_src>

<mosaic_0001>
module attributes {stable_mosaic.version = 11 : i64} {
  func.func @mhsa_kernel(%arg0: i32, %arg1: memref<16x32xf32, #tpu.memory_space<vmem>>, %arg2: memref<32x96xf32, #tpu.memory_space<vmem>>, %arg3: memref<32x32xf32, #tpu.memory_space<vmem>>, %arg4: memref<1x96xf32, #tpu.memory_space<vmem>>, %arg5: memref<1x32xf32, #tpu.memory_space<vmem>>, %arg6: memref<16x32xf32, #tpu.memory_space<vmem>>) attributes {dimension_semantics = [#tpu.dimension_semantics<arbitrary>], iteration_bounds = array<i64: 1>, scalar_prefetch = 0 : i64, scratch_operands = 0 : i64, tpu.core_type = #tpu.core_type<tc>, window_params = [{pipeline_mode = #tpu.pipeline_mode<synchronous>, transform_indices = @transform_0, window_bounds = array<i64: 16, 32>}, {pipeline_mode = #tpu.pipeline_mode<synchronous>, transform_indices = @transform_1, window_bounds = array<i64: 32, 96>}, {pipeline_mode = #tpu.pipeline_mode<synchronous>, transform_indices = @transform_2, window_bounds = array<i64: 32, 32>}, {pipeline_mode = #tpu.pipeline_mode<synchronous>, transform_indices = @transform_3, window_bounds = array<i64: 1, 96>}, {pipeline_mode = #tpu.pipeline_mode<synchronous>, transform_indices = @transform_4, window_bounds = array<i64: 1, 32>}, {pipeline_mode = #tpu.pipeline_mode<synchronous>, transform_indices = @transform_5, window_bounds = array<i64: 16, 32>}]} {
    %c0 = arith.constant 0 : index
    %c0_0 = arith.constant 0 : index
    %0 = vector.load %arg1[%c0, %c0_0] : memref<16x32xf32, #tpu.memory_space<vmem>>, vector<16x32xf32>
    %c0_1 = arith.constant 0 : index
    %c0_2 = arith.constant 0 : index
    %1 = vector.load %arg2[%c0_1, %c0_2] : memref<32x96xf32, #tpu.memory_space<vmem>>, vector<32x96xf32>
    %cst = arith.constant dense<0.000000e+00> : vector<16x96xf32>
    %2 = tpu.matmul %0, %1, %cst {dimension_numbers = #tpu.dot_dimension_numbers<[1], [0], [0], [1], [0, 0, 1, 1], [], []>} : vector<16x32xf32>, vector<32x96xf32>, vector<16x96xf32> -> vector<16x96xf32>
    %c0_3 = arith.constant 0 : index
    %c0_4 = arith.constant 0 : index
    %3 = vector.load %arg4[%c0_3, %c0_4] : memref<1x96xf32, #tpu.memory_space<vmem>>, vector<1x96xf32>
    %4 = vector.broadcast %3 : vector<1x96xf32> to vector<16x96xf32>
    %5 = arith.addf %2, %4 : vector<16x96xf32>
    %c0_5 = arith.constant 0 : index
    %c0_6 = arith.constant 0 : index
    %6 = vector.load %arg3[%c0_5, %c0_6] : memref<32x32xf32, #tpu.memory_space<vmem>>, vector<32x32xf32>
    %c0_7 = arith.constant 0 : index
    %c0_8 = arith.constant 0 : index
    %7 = vector.load %arg5[%c0_7, %c0_8] : memref<1x32xf32, #tpu.memory_space<vmem>>, vector<1x32xf32>
    %8 = vector.extract_strided_slice %5 {offsets = [0, 0], sizes = [8, 96], strides = [1, 1]} : vector<16x96xf32> to vector<8x96xf32>
    %9 = vector.shape_cast %7 : vector<1x32xf32> to vector<1x32xf32>
    %10 = vector.broadcast %9 : vector<1x32xf32> to vector<8x32xf32>
    %11 = vector.extract_strided_slice %8 {offsets = [0, 0], sizes = [8, 8], strides = [1, 1]} : vector<8x96xf32> to vector<8x8xf32>
    %12 = vector.extract_strided_slice %8 {offsets = [0, 32], sizes = [8, 8], strides = [1, 1]} : vector<8x96xf32> to vector<8x8xf32>
    %13 = vector.extract_strided_slice %8 {offsets = [0, 64], sizes = [8, 8], strides = [1, 1]} : vector<8x96xf32> to vector<8x8xf32>
    %14 = tpu.transpose %12, [1, 0] : vector<8x8xf32> -> vector<8x8xf32>
    %cst_9 = arith.constant dense<0.000000e+00> : vector<8x8xf32>
    %15 = tpu.matmul %11, %14, %cst_9 {dimension_numbers = #tpu.dot_dimension_numbers<[1], [0], [0], [1], [0, 0, 1, 1], [], []>} : vector<8x8xf32>, vector<8x8xf32>, vector<8x8xf32> -> vector<8x8xf32>
    %cst_10 = arith.constant 0.176776692 : f32
    %16 = vector.broadcast %cst_10 : f32 to vector<8x8xf32>
    %17 = arith.mulf %15, %16 : vector<8x8xf32>
    %cst_11 = arith.constant dense<0xFF800000> : vector<8xf32>
    %18 = vector.multi_reduction <maximumf>, %17, %cst_11 [1] : vector<8x8xf32> to vector<8xf32>
    %19 = vector.shape_cast %18 : vector<8xf32> to vector<8x1xf32>
    %20 = vector.broadcast %19 : vector<8x1xf32> to vector<8x8xf32>
    %21 = arith.subf %17, %20 : vector<8x8xf32>
    %22 = math.exp %21 : vector<8x8xf32>
    %cst_12 = arith.constant dense<0.000000e+00> : vector<8xf32>
    %23 = vector.multi_reduction <add>, %22, %cst_12 [1] : vector<8x8xf32> to vector<8xf32>
    %24 = vector.shape_cast %23 : vector<8xf32> to vector<8x1xf32>
    %25 = tpu.reciprocal %24 {approx = true} : vector<8x1xf32> -> vector<8x1xf32>
    %26 = vector.broadcast %25 : vector<8x1xf32> to vector<8x8xf32>
    %27 = arith.mulf %22, %26 : vector<8x8xf32>
    %cst_13 = arith.constant dense<0.000000e+00> : vector<8x8xf32>
    %28 = tpu.matmul %27, %13, %cst_13 {dimension_numbers = #tpu.dot_dimension_numbers<[1], [0], [0], [1], [0, 0, 1, 1], [], []>} : vector<8x8xf32>, vector<8x8xf32>, vector<8x8xf32> -> vector<8x8xf32>
    %29 = vector.extract_strided_slice %6 {offsets = [0, 0], sizes = [8, 32], strides = [1, 1]} : vector<32x32xf32> to vector<8x32xf32>
    %cst_14 = arith.constant dense<0.000000e+00> : vector<8x32xf32>
    %30 = tpu.matmul %28, %29, %cst_14 {dimension_numbers = #tpu.dot_dimension_numbers<[1], [0], [0], [1], [0, 0, 1, 1], [], []>} : vector<8x8xf32>, vector<8x32xf32>, vector<8x32xf32> -> vector<8x32xf32>
    %31 = arith.addf %10, %30 : vector<8x32xf32>
    %32 = vector.extract_strided_slice %8 {offsets = [0, 8], sizes = [8, 8], strides = [1, 1]} : vector<8x96xf32> to vector<8x8xf32>
    %33 = vector.extract_strided_slice %8 {offsets = [0, 40], sizes = [8, 8], strides = [1, 1]} : vector<8x96xf32> to vector<8x8xf32>
    %34 = vector.extract_strided_slice %8 {offsets = [0, 72], sizes = [8, 8], strides = [1, 1]} : vector<8x96xf32> to vector<8x8xf32>
    %35 = tpu.transpose %33, [1, 0] : vector<8x8xf32> -> vector<8x8xf32>
    %cst_15 = arith.constant dense<0.000000e+00> : vector<8x8xf32>
    %36 = tpu.matmul %32, %35, %cst_15 {dimension_numbers = #tpu.dot_dimension_numbers<[1], [0], [0], [1], [0, 0, 1, 1], [], []>} : vector<8x8xf32>, vector<8x8xf32>, vector<8x8xf32> -> vector<8x8xf32>
    %cst_16 = arith.constant 0.176776692 : f32
    %37 = vector.broadcast %cst_16 : f32 to vector<8x8xf32>
    %38 = arith.mulf %36, %37 : vector<8x8xf32>
    %cst_17 = arith.constant dense<0xFF800000> : vector<8xf32>
    %39 = vector.multi_reduction <maximumf>, %38, %cst_17 [1] : vector<8x8xf32> to vector<8xf32>
    %40 = vector.shape_cast %39 : vector<8xf32> to vector<8x1xf32>
    %41 = vector.broadcast %40 : vector<8x1xf32> to vector<8x8xf32>
    %42 = arith.subf %38, %41 : vector<8x8xf32>
    %43 = math.exp %42 : vector<8x8xf32>
    %cst_18 = arith.constant dense<0.000000e+00> : vector<8xf32>
    %44 = vector.multi_reduction <add>, %43, %cst_18 [1] : vector<8x8xf32> to vector<8xf32>
    %45 = vector.shape_cast %44 : vector<8xf32> to vector<8x1xf32>
    %46 = tpu.reciprocal %45 {approx = true} : vector<8x1xf32> -> vector<8x1xf32>
    %47 = vector.broadcast %46 : vector<8x1xf32> to vector<8x8xf32>
    %48 = arith.mulf %43, %47 : vector<8x8xf32>
    %cst_19 = arith.constant dense<0.000000e+00> : vector<8x8xf32>
    %49 = tpu.matmul %48, %34, %cst_19 {dimension_numbers = #tpu.dot_dimension_numbers<[1], [0], [0], [1], [0, 0, 1, 1], [], []>} : vector<8x8xf32>, vector<8x8xf32>, vector<8x8xf32> -> vector<8x8xf32>
    %50 = vector.extract_strided_slice %6 {offsets = [8, 0], sizes = [8, 32], strides = [1, 1]} : vector<32x32xf32> to vector<8x32xf32>
    %cst_20 = arith.constant dense<0.000000e+00> : vector<8x32xf32>
    %51 = tpu.matmul %49, %50, %cst_20 {dimension_numbers = #tpu.dot_dimension_numbers<[1], [0], [0], [1], [0, 0, 1, 1], [], []>} : vector<8x8xf32>, vector<8x32xf32>, vector<8x32xf32> -> vector<8x32xf32>
    %52 = arith.addf %31, %51 : vector<8x32xf32>
    %53 = vector.extract_strided_slice %8 {offsets = [0, 16], sizes = [8, 8], strides = [1, 1]} : vector<8x96xf32> to vector<8x8xf32>
    %54 = vector.extract_strided_slice %8 {offsets = [0, 48], sizes = [8, 8], strides = [1, 1]} : vector<8x96xf32> to vector<8x8xf32>
    %55 = vector.extract_strided_slice %8 {offsets = [0, 80], sizes = [8, 8], strides = [1, 1]} : vector<8x96xf32> to vector<8x8xf32>
    %56 = tpu.transpose %54, [1, 0] : vector<8x8xf32> -> vector<8x8xf32>
    %cst_21 = arith.constant dense<0.000000e+00> : vector<8x8xf32>
    %57 = tpu.matmul %53, %56, %cst_21 {dimension_numbers = #tpu.dot_dimension_numbers<[1], [0], [0], [1], [0, 0, 1, 1], [], []>} : vector<8x8xf32>, vector<8x8xf32>, vector<8x8xf32> -> vector<8x8xf32>
    %cst_22 = arith.constant 0.176776692 : f32
    %58 = vector.broadcast %cst_22 : f32 to vector<8x8xf32>
    %59 = arith.mulf %57, %58 : vector<8x8xf32>
    %cst_23 = arith.constant dense<0xFF800000> : vector<8xf32>
    %60 = vector.multi_reduction <maximumf>, %59, %cst_23 [1] : vector<8x8xf32> to vector<8xf32>
    %61 = vector.shape_cast %60 : vector<8xf32> to vector<8x1xf32>
    %62 = vector.broadcast %61 : vector<8x1xf32> to vector<8x8xf32>
    %63 = arith.subf %59, %62 : vector<8x8xf32>
    %64 = math.exp %63 : vector<8x8xf32>
    %cst_24 = arith.constant dense<0.000000e+00> : vector<8xf32>
    %65 = vector.multi_reduction <add>, %64, %cst_24 [1] : vector<8x8xf32> to vector<8xf32>
    %66 = vector.shape_cast %65 : vector<8xf32> to vector<8x1xf32>
    %67 = tpu.reciprocal %66 {approx = true} : vector<8x1xf32> -> vector<8x1xf32>
    %68 = vector.broadcast %67 : vector<8x1xf32> to vector<8x8xf32>
    %69 = arith.mulf %64, %68 : vector<8x8xf32>
    %cst_25 = arith.constant dense<0.000000e+00> : vector<8x8xf32>
    %70 = tpu.matmul %69, %55, %cst_25 {dimension_numbers = #tpu.dot_dimension_numbers<[1], [0], [0], [1], [0, 0, 1, 1], [], []>} : vector<8x8xf32>, vector<8x8xf32>, vector<8x8xf32> -> vector<8x8xf32>
    %71 = vector.extract_strided_slice %6 {offsets = [16, 0], sizes = [8, 32], strides = [1, 1]} : vector<32x32xf32> to vector<8x32xf32>
    %cst_26 = arith.constant dense<0.000000e+00> : vector<8x32xf32>
    %72 = tpu.matmul %70, %71, %cst_26 {dimension_numbers = #tpu.dot_dimension_numbers<[1], [0], [0], [1], [0, 0, 1, 1], [], []>} : vector<8x8xf32>, vector<8x32xf32>, vector<8x32xf32> -> vector<8x32xf32>
    %73 = arith.addf %52, %72 : vector<8x32xf32>
    %74 = vector.extract_strided_slice %8 {offsets = [0, 24], sizes = [8, 8], strides = [1, 1]} : vector<8x96xf32> to vector<8x8xf32>
    %75 = vector.extract_strided_slice %8 {offsets = [0, 56], sizes = [8, 8], strides = [1, 1]} : vector<8x96xf32> to vector<8x8xf32>
    %76 = vector.extract_strided_slice %8 {offsets = [0, 88], sizes = [8, 8], strides = [1, 1]} : vector<8x96xf32> to vector<8x8xf32>
    %77 = tpu.transpose %75, [1, 0] : vector<8x8xf32> -> vector<8x8xf32>
    %cst_27 = arith.constant dense<0.000000e+00> : vector<8x8xf32>
    %78 = tpu.matmul %74, %77, %cst_27 {dimension_numbers = #tpu.dot_dimension_numbers<[1], [0], [0], [1], [0, 0, 1, 1], [], []>} : vector<8x8xf32>, vector<8x8xf32>, vector<8x8xf32> -> vector<8x8xf32>
    %cst_28 = arith.constant 0.176776692 : f32
    %79 = vector.broadcast %cst_28 : f32 to vector<8x8xf32>
    %80 = arith.mulf %78, %79 : vector<8x8xf32>
    %cst_29 = arith.constant dense<0xFF800000> : vector<8xf32>
    %81 = vector.multi_reduction <maximumf>, %80, %cst_29 [1] : vector<8x8xf32> to vector<8xf32>
    %82 = vector.shape_cast %81 : vector<8xf32> to vector<8x1xf32>
    %83 = vector.broadcast %82 : vector<8x1xf32> to vector<8x8xf32>
    %84 = arith.subf %80, %83 : vector<8x8xf32>
    %85 = math.exp %84 : vector<8x8xf32>
    %cst_30 = arith.constant dense<0.000000e+00> : vector<8xf32>
    %86 = vector.multi_reduction <add>, %85, %cst_30 [1] : vector<8x8xf32> to vector<8xf32>
    %87 = vector.shape_cast %86 : vector<8xf32> to vector<8x1xf32>
    %88 = tpu.reciprocal %87 {approx = true} : vector<8x1xf32> -> vector<8x1xf32>
    %89 = vector.broadcast %88 : vector<8x1xf32> to vector<8x8xf32>
    %90 = arith.mulf %85, %89 : vector<8x8xf32>
    %cst_31 = arith.constant dense<0.000000e+00> : vector<8x8xf32>
    %91 = tpu.matmul %90, %76, %cst_31 {dimension_numbers = #tpu.dot_dimension_numbers<[1], [0], [0], [1], [0, 0, 1, 1], [], []>} : vector<8x8xf32>, vector<8x8xf32>, vector<8x8xf32> -> vector<8x8xf32>
    %92 = vector.extract_strided_slice %6 {offsets = [24, 0], sizes = [8, 32], strides = [1, 1]} : vector<32x32xf32> to vector<8x32xf32>
    %cst_32 = arith.constant dense<0.000000e+00> : vector<8x32xf32>
    %93 = tpu.matmul %91, %92, %cst_32 {dimension_numbers = #tpu.dot_dimension_numbers<[1], [0], [0], [1], [0, 0, 1, 1], [], []>} : vector<8x8xf32>, vector<8x32xf32>, vector<8x32xf32> -> vector<8x32xf32>
    %94 = arith.addf %73, %93 : vector<8x32xf32>
    %c0_33 = arith.constant 0 : index
    %c0_34 = arith.constant 0 : index
    %95 = vector.load %arg6[%c0_33, %c0_34] : memref<16x32xf32, #tpu.memory_space<vmem>>, vector<8x32xf32>
    tpu.vector_store %arg6[%c0_33, %c0_34], %94 {strides = array<i32>} : memref<16x32xf32, #tpu.memory_space<vmem>>, vector<8x32xf32>,
    %96 = vector.extract_strided_slice %5 {offsets = [8, 0], sizes = [8, 96], strides = [1, 1]} : vector<16x96xf32> to vector<8x96xf32>
    %97 = vector.shape_cast %7 : vector<1x32xf32> to vector<1x32xf32>
    %98 = vector.broadcast %97 : vector<1x32xf32> to vector<8x32xf32>
    %99 = vector.extract_strided_slice %96 {offsets = [0, 0], sizes = [8, 8], strides = [1, 1]} : vector<8x96xf32> to vector<8x8xf32>
    %100 = vector.extract_strided_slice %96 {offsets = [0, 32], sizes = [8, 8], strides = [1, 1]} : vector<8x96xf32> to vector<8x8xf32>
    %101 = vector.extract_strided_slice %96 {offsets = [0, 64], sizes = [8, 8], strides = [1, 1]} : vector<8x96xf32> to vector<8x8xf32>
    %102 = tpu.transpose %100, [1, 0] : vector<8x8xf32> -> vector<8x8xf32>
    %cst_35 = arith.constant dense<0.000000e+00> : vector<8x8xf32>
    %103 = tpu.matmul %99, %102, %cst_35 {dimension_numbers = #tpu.dot_dimension_numbers<[1], [0], [0], [1], [0, 0, 1, 1], [], []>} : vector<8x8xf32>, vector<8x8xf32>, vector<8x8xf32> -> vector<8x8xf32>
    %cst_36 = arith.constant 0.176776692 : f32
    %104 = vector.broadcast %cst_36 : f32 to vector<8x8xf32>
    %105 = arith.mulf %103, %104 : vector<8x8xf32>
    %cst_37 = arith.constant dense<0xFF800000> : vector<8xf32>
    %106 = vector.multi_reduction <maximumf>, %105, %cst_37 [1] : vector<8x8xf32> to vector<8xf32>
    %107 = vector.shape_cast %106 : vector<8xf32> to vector<8x1xf32>
    %108 = vector.broadcast %107 : vector<8x1xf32> to vector<8x8xf32>
    %109 = arith.subf %105, %108 : vector<8x8xf32>
    %110 = math.exp %109 : vector<8x8xf32>
    %cst_38 = arith.constant dense<0.000000e+00> : vector<8xf32>
    %111 = vector.multi_reduction <add>, %110, %cst_38 [1] : vector<8x8xf32> to vector<8xf32>
    %112 = vector.shape_cast %111 : vector<8xf32> to vector<8x1xf32>
    %113 = tpu.reciprocal %112 {approx = true} : vector<8x1xf32> -> vector<8x1xf32>
    %114 = vector.broadcast %113 : vector<8x1xf32> to vector<8x8xf32>
    %115 = arith.mulf %110, %114 : vector<8x8xf32>
    %cst_39 = arith.constant dense<0.000000e+00> : vector<8x8xf32>
    %116 = tpu.matmul %115, %101, %cst_39 {dimension_numbers = #tpu.dot_dimension_numbers<[1], [0], [0], [1], [0, 0, 1, 1], [], []>} : vector<8x8xf32>, vector<8x8xf32>, vector<8x8xf32> -> vector<8x8xf32>
    %117 = vector.extract_strided_slice %6 {offsets = [0, 0], sizes = [8, 32], strides = [1, 1]} : vector<32x32xf32> to vector<8x32xf32>
    %cst_40 = arith.constant dense<0.000000e+00> : vector<8x32xf32>
    %118 = tpu.matmul %116, %117, %cst_40 {dimension_numbers = #tpu.dot_dimension_numbers<[1], [0], [0], [1], [0, 0, 1, 1], [], []>} : vector<8x8xf32>, vector<8x32xf32>, vector<8x32xf32> -> vector<8x32xf32>
    %119 = arith.addf %98, %118 : vector<8x32xf32>
    %120 = vector.extract_strided_slice %96 {offsets = [0, 8], sizes = [8, 8], strides = [1, 1]} : vector<8x96xf32> to vector<8x8xf32>
    %121 = vector.extract_strided_slice %96 {offsets = [0, 40], sizes = [8, 8], strides = [1, 1]} : vector<8x96xf32> to vector<8x8xf32>
    %122 = vector.extract_strided_slice %96 {offsets = [0, 72], sizes = [8, 8], strides = [1, 1]} : vector<8x96xf32> to vector<8x8xf32>
    %123 = tpu.transpose %121, [1, 0] : vector<8x8xf32> -> vector<8x8xf32>
    %cst_41 = arith.constant dense<0.000000e+00> : vector<8x8xf32>
    %124 = tpu.matmul %120, %123, %cst_41 {dimension_numbers = #tpu.dot_dimension_numbers<[1], [0], [0], [1], [0, 0, 1, 1], [], []>} : vector<8x8xf32>, vector<8x8xf32>, vector<8x8xf32> -> vector<8x8xf32>
    %cst_42 = arith.constant 0.176776692 : f32
    %125 = vector.broadcast %cst_42 : f32 to vector<8x8xf32>
    %126 = arith.mulf %124, %125 : vector<8x8xf32>
    %cst_43 = arith.constant dense<0xFF800000> : vector<8xf32>
    %127 = vector.multi_reduction <maximumf>, %126, %cst_43 [1] : vector<8x8xf32> to vector<8xf32>
    %128 = vector.shape_cast %127 : vector<8xf32> to vector<8x1xf32>
    %129 = vector.broadcast %128 : vector<8x1xf32> to vector<8x8xf32>
    %130 = arith.subf %126, %129 : vector<8x8xf32>
    %131 = math.exp %130 : vector<8x8xf32>
    %cst_44 = arith.constant dense<0.000000e+00> : vector<8xf32>
    %132 = vector.multi_reduction <add>, %131, %cst_44 [1] : vector<8x8xf32> to vector<8xf32>
    %133 = vector.shape_cast %132 : vector<8xf32> to vector<8x1xf32>
    %134 = tpu.reciprocal %133 {approx = true} : vector<8x1xf32> -> vector<8x1xf32>
    %135 = vector.broadcast %134 : vector<8x1xf32> to vector<8x8xf32>
    %136 = arith.mulf %131, %135 : vector<8x8xf32>
    %cst_45 = arith.constant dense<0.000000e+00> : vector<8x8xf32>
    %137 = tpu.matmul %136, %122, %cst_45 {dimension_numbers = #tpu.dot_dimension_numbers<[1], [0], [0], [1], [0, 0, 1, 1], [], []>} : vector<8x8xf32>, vector<8x8xf32>, vector<8x8xf32> -> vector<8x8xf32>
    %138 = vector.extract_strided_slice %6 {offsets = [8, 0], sizes = [8, 32], strides = [1, 1]} : vector<32x32xf32> to vector<8x32xf32>
    %cst_46 = arith.constant dense<0.000000e+00> : vector<8x32xf32>
    %139 = tpu.matmul %137, %138, %cst_46 {dimension_numbers = #tpu.dot_dimension_numbers<[1], [0], [0], [1], [0, 0, 1, 1], [], []>} : vector<8x8xf32>, vector<8x32xf32>, vector<8x32xf32> -> vector<8x32xf32>
    %140 = arith.addf %119, %139 : vector<8x32xf32>
    %141 = vector.extract_strided_slice %96 {offsets = [0, 16], sizes = [8, 8], strides = [1, 1]} : vector<8x96xf32> to vector<8x8xf32>
    %142 = vector.extract_strided_slice %96 {offsets = [0, 48], sizes = [8, 8], strides = [1, 1]} : vector<8x96xf32> to vector<8x8xf32>
    %143 = vector.extract_strided_slice %96 {offsets = [0, 80], sizes = [8, 8], strides = [1, 1]} : vector<8x96xf32> to vector<8x8xf32>
    %144 = tpu.transpose %142, [1, 0] : vector<8x8xf32> -> vector<8x8xf32>
    %cst_47 = arith.constant dense<0.000000e+00> : vector<8x8xf32>
    %145 = tpu.matmul %141, %144, %cst_47 {dimension_numbers = #tpu.dot_dimension_numbers<[1], [0], [0], [1], [0, 0, 1, 1], [], []>} : vector<8x8xf32>, vector<8x8xf32>, vector<8x8xf32> -> vector<8x8xf32>
    %cst_48 = arith.constant 0.176776692 : f32
    %146 = vector.broadcast %cst_48 : f32 to vector<8x8xf32>
    %147 = arith.mulf %145, %146 : vector<8x8xf32>
    %cst_49 = arith.constant dense<0xFF800000> : vector<8xf32>
    %148 = vector.multi_reduction <maximumf>, %147, %cst_49 [1] : vector<8x8xf32> to vector<8xf32>
    %149 = vector.shape_cast %148 : vector<8xf32> to vector<8x1xf32>
    %150 = vector.broadcast %149 : vector<8x1xf32> to vector<8x8xf32>
    %151 = arith.subf %147, %150 : vector<8x8xf32>
    %152 = math.exp %151 : vector<8x8xf32>
    %cst_50 = arith.constant dense<0.000000e+00> : vector<8xf32>
    %153 = vector.multi_reduction <add>, %152, %cst_50 [1] : vector<8x8xf32> to vector<8xf32>
    %154 = vector.shape_cast %153 : vector<8xf32> to vector<8x1xf32>
    %155 = tpu.reciprocal %154 {approx = true} : vector<8x1xf32> -> vector<8x1xf32>
    %156 = vector.broadcast %155 : vector<8x1xf32> to vector<8x8xf32>
    %157 = arith.mulf %152, %156 : vector<8x8xf32>
    %cst_51 = arith.constant dense<0.000000e+00> : vector<8x8xf32>
    %158 = tpu.matmul %157, %143, %cst_51 {dimension_numbers = #tpu.dot_dimension_numbers<[1], [0], [0], [1], [0, 0, 1, 1], [], []>} : vector<8x8xf32>, vector<8x8xf32>, vector<8x8xf32> -> vector<8x8xf32>
    %159 = vector.extract_strided_slice %6 {offsets = [16, 0], sizes = [8, 32], strides = [1, 1]} : vector<32x32xf32> to vector<8x32xf32>
    %cst_52 = arith.constant dense<0.000000e+00> : vector<8x32xf32>
    %160 = tpu.matmul %158, %159, %cst_52 {dimension_numbers = #tpu.dot_dimension_numbers<[1], [0], [0], [1], [0, 0, 1, 1], [], []>} : vector<8x8xf32>, vector<8x32xf32>, vector<8x32xf32> -> vector<8x32xf32>
    %161 = arith.addf %140, %160 : vector<8x32xf32>
    %162 = vector.extract_strided_slice %96 {offsets = [0, 24], sizes = [8, 8], strides = [1, 1]} : vector<8x96xf32> to vector<8x8xf32>
    %163 = vector.extract_strided_slice %96 {offsets = [0, 56], sizes = [8, 8], strides = [1, 1]} : vector<8x96xf32> to vector<8x8xf32>
    %164 = vector.extract_strided_slice %96 {offsets = [0, 88], sizes = [8, 8], strides = [1, 1]} : vector<8x96xf32> to vector<8x8xf32>
    %165 = tpu.transpose %163, [1, 0] : vector<8x8xf32> -> vector<8x8xf32>
    %cst_53 = arith.constant dense<0.000000e+00> : vector<8x8xf32>
    %166 = tpu.matmul %162, %165, %cst_53 {dimension_numbers = #tpu.dot_dimension_numbers<[1], [0], [0], [1], [0, 0, 1, 1], [], []>} : vector<8x8xf32>, vector<8x8xf32>, vector<8x8xf32> -> vector<8x8xf32>
    %cst_54 = arith.constant 0.176776692 : f32
    %167 = vector.broadcast %cst_54 : f32 to vector<8x8xf32>
    %168 = arith.mulf %166, %167 : vector<8x8xf32>
    %cst_55 = arith.constant dense<0xFF800000> : vector<8xf32>
    %169 = vector.multi_reduction <maximumf>, %168, %cst_55 [1] : vector<8x8xf32> to vector<8xf32>
    %170 = vector.shape_cast %169 : vector<8xf32> to vector<8x1xf32>
    %171 = vector.broadcast %170 : vector<8x1xf32> to vector<8x8xf32>
    %172 = arith.subf %168, %171 : vector<8x8xf32>
    %173 = math.exp %172 : vector<8x8xf32>
    %cst_56 = arith.constant dense<0.000000e+00> : vector<8xf32>
    %174 = vector.multi_reduction <add>, %173, %cst_56 [1] : vector<8x8xf32> to vector<8xf32>
    %175 = vector.shape_cast %174 : vector<8xf32> to vector<8x1xf32>
    %176 = tpu.reciprocal %175 {approx = true} : vector<8x1xf32> -> vector<8x1xf32>
    %177 = vector.broadcast %176 : vector<8x1xf32> to vector<8x8xf32>
    %178 = arith.mulf %173, %177 : vector<8x8xf32>
    %cst_57 = arith.constant dense<0.000000e+00> : vector<8x8xf32>
    %179 = tpu.matmul %178, %164, %cst_57 {dimension_numbers = #tpu.dot_dimension_numbers<[1], [0], [0], [1], [0, 0, 1, 1], [], []>} : vector<8x8xf32>, vector<8x8xf32>, vector<8x8xf32> -> vector<8x8xf32>
    %180 = vector.extract_strided_slice %6 {offsets = [24, 0], sizes = [8, 32], strides = [1, 1]} : vector<32x32xf32> to vector<8x32xf32>
    %cst_58 = arith.constant dense<0.000000e+00> : vector<8x32xf32>
    %181 = tpu.matmul %179, %180, %cst_58 {dimension_numbers = #tpu.dot_dimension_numbers<[1], [0], [0], [1], [0, 0, 1, 1], [], []>} : vector<8x8xf32>, vector<8x32xf32>, vector<8x32xf32> -> vector<8x32xf32>
    %182 = arith.addf %161, %181 : vector<8x32xf32>
    %c8 = arith.constant 8 : index
    %c0_59 = arith.constant 0 : index
    %183 = vector.load %arg6[%c8, %c0_59] : memref<16x32xf32, #tpu.memory_space<vmem>>, vector<8x32xf32>
    tpu.vector_store %arg6[%c8, %c0_59], %182 {strides = array<i32>} : memref<16x32xf32, #tpu.memory_space<vmem>>, vector<8x32xf32>,
    return
  }
  func.func @transform_0(%arg0: i32) -> (i32, i32) {
    %c0_i32 = arith.constant 0 : i32
    %c0_i32_0 = arith.constant 0 : i32
    %c0_i32_1 = arith.constant 0 : i32
    return %c0_i32, %c0_i32_0 : i32, i32
  }
  func.func @transform_1(%arg0: i32) -> (i32, i32) {
    %c0_i32 = arith.constant 0 : i32
    %c0_i32_0 = arith.constant 0 : i32
    %c0_i32_1 = arith.constant 0 : i32
    return %c0_i32, %c0_i32_0 : i32, i32
  }
  func.func @transform_2(%arg0: i32) -> (i32, i32) {
    %c0_i32 = arith.constant 0 : i32
    %c0_i32_0 = arith.constant 0 : i32
    %c0_i32_1 = arith.constant 0 : i32
    return %c0_i32, %c0_i32_0 : i32, i32
  }
  func.func @transform_3(%arg0: i32) -> (i32, i32) {
    %c0_i32 = arith.constant 0 : i32
    %c0_i32_0 = arith.constant 0 : i32
    %c0_i32_1 = arith.constant 0 : i32
    return %c0_i32, %c0_i32_0 : i32, i32
  }
  func.func @transform_4(%arg0: i32) -> (i32, i32) {
    %c0_i32 = arith.constant 0 : i32
    %c0_i32_0 = arith.constant 0 : i32
    %c0_i32_1 = arith.constant 0 : i32
    return %c0_i32, %c0_i32_0 : i32, i32
  }
  func.func @transform_5(%arg0: i32) -> (i32, i32) {
    %c0_i32 = arith.constant 0 : i32
    %c0_i32_0 = arith.constant 0 : i32
    %c0_i32_1 = arith.constant 0 : i32
    return %c0_i32, %c0_i32_0 : i32, i32
  }
}

</mosaic_0001>

<llo_original>
// kernel: tpu_custom_call.1
$region0: #{tpu_custom_call.1}
  #allocation0 [shape = 'u32[]', space=smem, size = 0x4, offset = 0x4, fixed_abs, tag = 'smem constant byte address 0x4 - core index']
  #allocation1 [shape = 'u32[144,128]{1,0:T(1,128)}', space=vmem, size = 0x12000, scoped, tag = 'internal scratch']
  %s0 = inlined_call_operand.hbm [shape: f32[16,32], index: 0, kind: input, shape index: {}]
  %s1 = inlined_call_operand.hbm [shape: f32[32,96], index: 1, kind: input, shape index: {}]
  %s2 = inlined_call_operand.hbm [shape: f32[32,32], index: 2, kind: input, shape index: {}]
  %s3 = inlined_call_operand.vmem [shape: f32[1,96], index: 3, kind: input, shape index: {}]
  %s4 = inlined_call_operand.vmem [shape: f32[1,32], index: 4, kind: input, shape index: {}]
  %s5 = inlined_call_operand.hbm [shape: f32[16,32], index: 5, kind: output, shape index: {}]
  %s6 = sld [smem:[#allocation0]]
  $region42: #{tpu_custom_call.1} parent=0
    _
  %s8 = ssub.s32 1, %s6
  %s9 = scalar_select 0, %s8, %s6
  $region1: #{tpu_custom_call.1} parent=0
    #allocation2 [shape = 'u8[8192]{0}', space=vmem, size = 0x2000, scoped, tag = 'input window, operand 0, single buffered']
    #allocation3 [shape = 's32[1]{0}', space=sflag, size = 0x4, scoped, tag = 'scoped memory for tpu_custom_call.1']
    #allocation4 [shape = 's32[1]{0}', space=sflag, size = 0x4, scoped, tag = 'scoped memory for tpu_custom_call.1']
    #allocation5 [shape = 'u8[16384]{0}', space=vmem, size = 0x4000, scoped, tag = 'input window, operand 1, single buffered']
    #allocation6 [shape = 's32[1]{0}', space=sflag, size = 0x4, scoped, tag = 'scoped memory for tpu_custom_call.1']
    #allocation7 [shape = 'u8[16384]{0}', space=vmem, size = 0x4000, scoped, tag = 'input window, operand 2, single buffered']
    #allocation8 [shape = 'u8[8192]{0}', space=vmem, size = 0x2000, scoped, tag = 'output window, operand 0, single buffered']
    %10 = vsyncpa [#allocation3], 0
    %11 = vsyncpa [#allocation6], 0
    %12 = vsyncpa [#allocation4], 0
    // Predicated region
    $region2: #{tpu_custom_call.1} parent=1 // pred_check
      _
    $region3: #{tpu_custom_call.1} parent=1 // pred_check_branch
      %14 = sbr.rel (0) target = $region5
    $region4: #{tpu_custom_call.1} parent=1 // pred_region
      %s16 = ssub.s32 256, 256
      %17 = vsyncadd [#allocation3], %s16
      %s18 = sshll.u32 [#allocation2], 4
      %s19 = int_to_ptr.vmem [resolvable:$true] %s18
      %24 = dma.hbm_to_vmem [thread:$0]  %s0, 256, %s19, [#allocation3], 128, 128, 8
    $region5: #{tpu_custom_call.1} parent=1 // pred_fallthru
      _
    // Predicated region
    $region6: #{tpu_custom_call.1} parent=1 // pred_check
      _
    $region7: #{tpu_custom_call.1} parent=1 // pred_check_branch
      %26 = sbr.rel (0) target = $region9
    $region8: #{tpu_custom_call.1} parent=1 // pred_region
      %s28 = ssub.s32 512, 512
      %29 = vsyncadd [#allocation6], %s28
      %s30 = sshll.u32 [#allocation5], 4
      %s31 = int_to_ptr.vmem [resolvable:$true] %s30
      %36 = dma.hbm_to_vmem [thread:$0]  %s1, 512, %s31, [#allocation6], 128, 128, 8
    $region9: #{tpu_custom_call.1} parent=1 // pred_fallthru
      _
    // Predicated region
    $region10: #{tpu_custom_call.1} parent=1 // pred_check
      _
    $region11: #{tpu_custom_call.1} parent=1 // pred_check_branch
      %38 = sbr.rel (0) target = $region13
    $region12: #{tpu_custom_call.1} parent=1 // pred_region
      %s40 = ssub.s32 512, 512
      %41 = vsyncadd [#allocation6], %s40
      %s42 = sshll.u32 [#allocation7], 4
      %s43 = int_to_ptr.vmem [resolvable:$true] %s42
      %48 = dma.hbm_to_vmem [thread:$0]  %s2, 512, %s43, [#allocation6], 128, 128, 8
    $region13: #{tpu_custom_call.1} parent=1 // pred_fallthru
      _
    // Predicated region
    $region14: #{tpu_custom_call.1} parent=1 // pred_check
      _
    $region15: #{tpu_custom_call.1} parent=1 // pred_check_branch
      %50 = sbr.rel (0) target = $region17
    $region16: #{tpu_custom_call.1} parent=1 // pred_region
      _
    $region17: #{tpu_custom_call.1} parent=1 // pred_fallthru
      _
    // Predicated region
    $region18: #{tpu_custom_call.1} parent=1 // pred_check
      _
    $region19: #{tpu_custom_call.1} parent=1 // pred_check_branch
      %52 = sbr.rel (0) target = $region21
    $region20: #{tpu_custom_call.1} parent=1 // pred_region
      _
    $region21: #{tpu_custom_call.1} parent=1 // pred_fallthru
      _
    // Predicated region
    $region22: #{tpu_custom_call.1} parent=1 // pred_check
      _
    $region23: #{tpu_custom_call.1} parent=1 // pred_check_branch
      %54 = sbr.rel (0) target = $region25
    $region24: #{tpu_custom_call.1} parent=1 // pred_region
      %55 = dma.done [#allocation3], 256
    $region25: #{tpu_custom_call.1} parent=1 // pred_fallthru
      _
    // Predicated region
    $region26: #{tpu_custom_call.1} parent=1 // pred_check
      _
    $region27: #{tpu_custom_call.1} parent=1 // pred_check_branch
      %57 = sbr.rel (0) target = $region29
    $region28: #{tpu_custom_call.1} parent=1 // pred_region
      %58 = dma.done [#allocation6], 512
    $region29: #{tpu_custom_call.1} parent=1 // pred_fallthru
      _
    // Predicated region
    $region30: #{tpu_custom_call.1} parent=1 // pred_check
      _
    $region31: #{tpu_custom_call.1} parent=1 // pred_check_branch
      %60 = sbr.rel (0) target = $region33
    $region32: #{tpu_custom_call.1} parent=1 // pred_region
      %61 = dma.done [#allocation6], 512
    $region33: #{tpu_custom_call.1} parent=1 // pred_fallthru
      _
    %v62 = vld [vmem:[#allocation2] sm:$0xff]
    %v63 = vld [vmem:[#allocation2 + $0x8] sm:$0xff]
    %v64 = vld [vmem:[#allocation5] sm:$0xff]
    %v65 = vld [vmem:[#allocation5 + $0x8] sm:$0xff]
    %v66 = vld [vmem:[#allocation5 + $0x10] sm:$0xff]
    %v67 = vld [vmem:[#allocation5 + $0x18] sm:$0xff]
    %v68 = vld [vmem:[%s3] sm:$0x1]
    %v70 = vlaneseq
    %v71 = vshrl.u32 %v70, 7
    %v72 = vsub.s32 0, %v71
    %v73 = vrot.slane %v68, %v72
    %vm75 = vcmask 261120
    %v77 = vsel %vm75, %v62, 0
    %v80 = vsel %vm75, %v63, 0
    %82 = vmatprep.subr.mxu0 0.0
    %83 = vmatpush1.msra.mxu0 0.0
    %84 = vmatprep.subr.mxu0 0.0
    %85 = vmatpush1.msra.mxu0 0.0
    %86 = vmatprep.subr.mxu0 0.0
    %87 = vmatpush1.msra.mxu0 0.0
    %88 = vmatprep.subr.mxu0 0.0
    %89 = vmatpush1.msra.mxu0 0.0
    %90 = vmatprep.subr.mxu0 0.0
    %91 = vmatpush1.msra.mxu0 0.0
    %92 = vmatprep.subr.mxu0 0.0
    %93 = vmatpush1.msra.mxu0 0.0
    %94 = vmatprep.subr.mxu0 0.0
    %95 = vmatpush1.msra.mxu0 0.0
    %96 = vmatprep.subr.mxu0 0.0
    %97 = vmatpush1.msra.mxu0 0.0
    %98 = vmatprep.subr.mxu0 0.0
    %99 = vmatpush1.msra.mxu0 0.0
    %100 = vmatprep.subr.mxu0 0.0
    %101 = vmatpush1.msra.mxu0 0.0
    %102 = vmatprep.subr.mxu0 0.0
    %103 = vmatpush1.msra.mxu0 0.0
    %104 = vmatprep.subr.mxu0 0.0
    %105 = vmatpush1.msra.mxu0 0.0
    %106 = vmatprep.subr.mxu0 0.0
    %107 = vmatpush1.msra.mxu0 %v67
    %108 = vmatprep.subr.mxu0 0.0
    %109 = vmatpush1.msra.mxu0 %v66
    %110 = vmatprep.subr.mxu0 0.0
    %111 = vmatpush1.msra.mxu0 %v65
    %112 = vmatprep.subr.mxu0 0.0
    %113 = vmatpush1.msra.mxu0 %v64
    %114 = vmatprep.subr.mxu0 0.0
    %115 = vmatpush2.msra.mxu0 0.0
    %116 = vmatprep.subr.mxu0 0.0
    %117 = vmatpush2.msra.mxu0 0.0
    %118 = vmatprep.subr.mxu0 0.0
    %119 = vmatpush2.msra.mxu0 0.0
    %120 = vmatprep.subr.mxu0 0.0
    %121 = vmatpush2.msra.mxu0 0.0
    %122 = vmatprep.subr.mxu0 0.0
    %123 = vmatpush2.msra.mxu0 0.0
    %124 = vmatprep.subr.mxu0 0.0
    %125 = vmatpush2.msra.mxu0 0.0
    %126 = vmatprep.subr.mxu0 0.0
    %127 = vmatpush2.msra.mxu0 0.0
    %128 = vmatprep.subr.mxu0 0.0
    %129 = vmatpush2.msra.mxu0 0.0
    %130 = vmatprep.subr.mxu0 0.0
    %131 = vmatpush2.msra.mxu0 0.0
    %132 = vmatprep.subr.mxu0 0.0
    %133 = vmatpush2.msra.mxu0 0.0
    %134 = vmatprep.subr.mxu0 0.0
    %135 = vmatpush2.msra.mxu0 0.0
    %136 = vmatprep.subr.mxu0 0.0
    %137 = vmatpush2.msra.mxu0 0.0
    %138 = vmatprep.subr.mxu0 0.0
    %139 = vmatpush2.msra.mxu0 0.0
    %140 = vmatprep.subr.mxu0 0.0
    %141 = vmatpush2.msra.mxu0 0.0
    %142 = vmatprep.subr.mxu0 0.0
    %143 = vmatpush2.msra.mxu0 0.0
    %144 = vmatprep.subr.mxu0 0.0
    %145 = vmatpush2.msra.mxu0 0.0
    %146 = vmatprep.mubr.f32.mxu0 0.0
    %147 = vmatmul.mubr.f32.gmra.mxu0 %v77
    %v148 = vpop.f32.mrf.mxu0
    %v149 = vadd.f32 %v73, %v148
    %v150 = vpop.f32.mrf.mxu0
    %151 = vmatprep.mubr.f32.mxu0 0.0
    %152 = vmatmul.mubr.f32.gmra.mxu0 %v80
    %v153 = vpop.f32.mrf.mxu0
    %v154 = vadd.f32 %v73, %v153
    %v155 = vpop.f32.mrf.mxu0
    %156 = vdwg.mxu0
    %v157 = vld [vmem:[#allocation7] sm:$0xff]
    %v158 = vld [vmem:[#allocation7 + $0x8] sm:$0xff]
    %v159 = vld [vmem:[#allocation7 + $0x10] sm:$0xff]
    %v160 = vld [vmem:[#allocation7 + $0x18] sm:$0xff]
    %v161 = vld [vmem:[%s4] sm:$0x1]
    %v163 = vlaneseq
    %v164 = vshrl.u32 %v163, 7
    %v165 = vsub.s32 0, %v164
    %v166 = vrot.slane %v161, %v165
    %169 = vrot.lane.b32.xlu0 %v149, 96
    %v170 = vpop.permute.xlu0 %169
    %vm171 = vcmask 64512
    %v172 = vsel %vm171, %v149, 0
    %v174 = vsel %vm171, %v170, 0
    %176 = vmatprep.subr.mxu0 0.0
    %177 = vmatpush1.xpose.msra.mxu0 0.0
    %178 = vmatprep.subr.mxu0 0.0
    %179 = vmatpush1.xpose.msra.mxu0 0.0
    %180 = vmatprep.subr.mxu0 0.0
    %181 = vmatpush1.xpose.msra.mxu0 0.0
    %182 = vmatprep.subr.mxu0 0.0
    %183 = vmatpush1.xpose.msra.mxu0 0.0
    %184 = vmatprep.subr.mxu0 0.0
    %185 = vmatpush1.xpose.msra.mxu0 0.0
    %186 = vmatprep.subr.mxu0 0.0
    %187 = vmatpush1.xpose.msra.mxu0 0.0
    %188 = vmatprep.subr.mxu0 0.0
    %189 = vmatpush1.xpose.msra.mxu0 0.0
    %190 = vmatprep.subr.mxu0 0.0
    %191 = vmatpush1.xpose.msra.mxu0 0.0
    %192 = vmatprep.subr.mxu0 0.0
    %193 = vmatpush1.xpose.msra.mxu0 0.0
    %194 = vmatprep.subr.mxu0 0.0
    %195 = vmatpush1.xpose.msra.mxu0 0.0
    %196 = vmatprep.subr.mxu0 0.0
    %197 = vmatpush1.xpose.msra.mxu0 0.0
    %198 = vmatprep.subr.mxu0 0.0
    %199 = vmatpush1.xpose.msra.mxu0 0.0
    %200 = vmatprep.subr.mxu0 0.0
    %201 = vmatpush1.xpose.msra.mxu0 0.0
    %202 = vmatprep.subr.mxu0 0.0
    %203 = vmatpush1.xpose.msra.mxu0 0.0
    %204 = vmatprep.subr.mxu0 0.0
    %205 = vmatpush1.xpose.msra.mxu0 0.0
    %206 = vmatprep.subr.mxu0 0.0
    %207 = vmatpush1.xpose.msra.mxu0 %v174
    %208 = vmatprep.subr.mxu0 0.0
    %209 = vmatpush2.xpose.msra.mxu0 0.0
    %210 = vmatprep.subr.mxu0 0.0
    %211 = vmatpush2.xpose.msra.mxu0 0.0
    %212 = vmatprep.subr.mxu0 0.0
    %213 = vmatpush2.xpose.msra.mxu0 0.0
    %214 = vmatprep.subr.mxu0 0.0
    %215 = vmatpush2.xpose.msra.mxu0 0.0
    %216 = vmatprep.subr.mxu0 0.0
    %217 = vmatpush2.xpose.msra.mxu0 0.0
    %218 = vmatprep.subr.mxu0 0.0
    %219 = vmatpush2.xpose.msra.mxu0 0.0
    %220 = vmatprep.subr.mxu0 0.0
    %221 = vmatpush2.xpose.msra.mxu0 0.0
    %222 = vmatprep.subr.mxu0 0.0
    %223 = vmatpush2.xpose.msra.mxu0 0.0
    %224 = vmatprep.subr.mxu0 0.0
    %225 = vmatpush2.xpose.msra.mxu0 0.0
    %226 = vmatprep.subr.mxu0 0.0
    %227 = vmatpush2.xpose.msra.mxu0 0.0
    %228 = vmatprep.subr.mxu0 0.0
    %229 = vmatpush2.xpose.msra.mxu0 0.0
    %230 = vmatprep.subr.mxu0 0.0
    %231 = vmatpush2.xpose.msra.mxu0 0.0
    %232 = vmatprep.subr.mxu0 0.0
    %233 = vmatpush2.xpose.msra.mxu0 0.0
    %234 = vmatprep.subr.mxu0 0.0
    %235 = vmatpush2.xpose.msra.mxu0 0.0
    %236 = vmatprep.subr.mxu0 0.0
    %237 = vmatpush2.xpose.msra.mxu0 0.0
    %238 = vmatprep.subr.mxu0 0.0
    %239 = vmatpush2.xpose.msra.mxu0 0.0
    %240 = vmatprep.mubr.f32.mxu0 0.0
    %241 = vmatmul.mubr.f32.gmra.mxu0 %v172
    %v242 = vpop.f32.mrf.mxu0
    %v243 = vadd.f32 0.0, %v242
    %v244 = vpop.f32.mrf.mxu0
    %245 = vdwg.mxu0
    %v246 = vmul.f32 %v243, 0.17677669
    %v247 = vsel %vm171, %v246, -inf
    %248 = vmax.xlane.f32.xlu0 %v247
    %v249 = vpop.xlane.xlu0 %248
    %v250 = vsub.f32 %v246, %v249
    %v251 = vmul.f32 %v250, 1.442695
    %v252 = vpow.pop %v251
    %v253 = vsel %vm171, %v252, 0.0
    %254 = vadd.xlane.f32.xlu0 %v253
    %v255 = vpop.xlane.xlu0 %254
    %v256 = vrcp.pop %v255
    %v257 = vmul.f32 %v252, %v256
    %258 = vrot.lane.b32.xlu0 %v149, 64
    %v259 = vpop.permute.xlu0 %258
    %v262 = vsel %vm171, %v257, 0
    %264 = vmatprep.subr.mxu0 0.0
    %265 = vmatpush1.msra.mxu0 0.0
    %266 = vmatprep.subr.mxu0 0.0
    %267 = vmatpush1.msra.mxu0 0.0
    %268 = vmatprep.subr.mxu0 0.0
    %269 = vmatpush1.msra.mxu0 0.0
    %270 = vmatprep.subr.mxu0 0.0
    %271 = vmatpush1.msra.mxu0 0.0
    %272 = vmatprep.subr.mxu0 0.0
    %273 = vmatpush1.msra.mxu0 0.0
    %274 = vmatprep.subr.mxu0 0.0
    %275 = vmatpush1.msra.mxu0 0.0
    %276 = vmatprep.subr.mxu0 0.0
    %277 = vmatpush1.msra.mxu0 0.0
    %278 = vmatprep.subr.mxu0 0.0
    %279 = vmatpush1.msra.mxu0 0.0
    %280 = vmatprep.subr.mxu0 0.0
    %281 = vmatpush1.msra.mxu0 0.0
    %282 = vmatprep.subr.mxu0 0.0
    %283 = vmatpush1.msra.mxu0 0.0
    %284 = vmatprep.subr.mxu0 0.0
    %285 = vmatpush1.msra.mxu0 0.0
    %286 = vmatprep.subr.mxu0 0.0
    %287 = vmatpush1.msra.mxu0 0.0
    %288 = vmatprep.subr.mxu0 0.0
    %289 = vmatpush1.msra.mxu0 0.0
    %290 = vmatprep.subr.mxu0 0.0
    %291 = vmatpush1.msra.mxu0 0.0
    %292 = vmatprep.subr.mxu0 0.0
    %293 = vmatpush1.msra.mxu0 0.0
    %294 = vmatprep.subr.mxu0 0.0
    %295 = vmatpush1.msra.mxu0 %v259
    %296 = vmatprep.subr.mxu0 0.0
    %297 = vmatpush2.msra.mxu0 0.0
    %298 = vmatprep.subr.mxu0 0.0
    %299 = vmatpush2.msra.mxu0 0.0
    %300 = vmatprep.subr.mxu0 0.0
    %301 = vmatpush2.msra.mxu0 0.0
    %302 = vmatprep.subr.mxu0 0.0
    %303 = vmatpush2.msra.mxu0 0.0
    %304 = vmatprep.subr.mxu0 0.0
    %305 = vmatpush2.msra.mxu0 0.0
    %306 = vmatprep.subr.mxu0 0.0
    %307 = vmatpush2.msra.mxu0 0.0
    %308 = vmatprep.subr.mxu0 0.0
    %309 = vmatpush2.msra.mxu0 0.0
    %310 = vmatprep.subr.mxu0 0.0
    %311 = vmatpush2.msra.mxu0 0.0
    %312 = vmatprep.subr.mxu0 0.0
    %313 = vmatpush2.msra.mxu0 0.0
    %314 = vmatprep.subr.mxu0 0.0
    %315 = vmatpush2.msra.mxu0 0.0
    %316 = vmatprep.subr.mxu0 0.0
    %317 = vmatpush2.msra.mxu0 0.0
    %318 = vmatprep.subr.mxu0 0.0
    %319 = vmatpush2.msra.mxu0 0.0
    %320 = vmatprep.subr.mxu0 0.0
    %321 = vmatpush2.msra.mxu0 0.0
    %322 = vmatprep.subr.mxu0 0.0
    %323 = vmatpush2.msra.mxu0 0.0
    %324 = vmatprep.subr.mxu0 0.0
    %325 = vmatpush2.msra.mxu0 0.0
    %326 = vmatprep.subr.mxu0 0.0
    %327 = vmatpush2.msra.mxu0 0.0
    %328 = vmatprep.mubr.f32.mxu0 0.0
    %329 = vmatmul.mubr.f32.gmra.mxu0 %v262
    %v330 = vpop.f32.mrf.mxu0
    %v331 = vadd.f32 0.0, %v330
    %v332 = vpop.f32.mrf.mxu0
    %333 = vdwg.mxu0
    %v335 = vsel %vm171, %v331, 0
    %337 = vmatprep.subr.mxu0 0.0
    %338 = vmatpush1.msra.mxu0 0.0
    %339 = vmatprep.subr.mxu0 0.0
    %340 = vmatpush1.msra.mxu0 0.0
    %341 = vmatprep.subr.mxu0 0.0
    %342 = vmatpush1.msra.mxu0 0.0
    %343 = vmatprep.subr.mxu0 0.0
    %344 = vmatpush1.msra.mxu0 0.0
    %345 = vmatprep.subr.mxu0 0.0
    %346 = vmatpush1.msra.mxu0 0.0
    %347 = vmatprep.subr.mxu0 0.0
    %348 = vmatpush1.msra.mxu0 0.0
    %349 = vmatprep.subr.mxu0 0.0
    %350 = vmatpush1.msra.mxu0 0.0
    %351 = vmatprep.subr.mxu0 0.0
    %352 = vmatpush1.msra.mxu0 0.0
    %353 = vmatprep.subr.mxu0 0.0
    %354 = vmatpush1.msra.mxu0 0.0
    %355 = vmatprep.subr.mxu0 0.0
    %356 = vmatpush1.msra.mxu0 0.0
    %357 = vmatprep.subr.mxu0 0.0
    %358 = vmatpush1.msra.mxu0 0.0
    %359 = vmatprep.subr.mxu0 0.0
    %360 = vmatpush1.msra.mxu0 0.0
    %361 = vmatprep.subr.mxu0 0.0
    %362 = vmatpush1.msra.mxu0 0.0
    %363 = vmatprep.subr.mxu0 0.0
    %364 = vmatpush1.msra.mxu0 0.0
    %365 = vmatprep.subr.mxu0 0.0
    %366 = vmatpush1.msra.mxu0 0.0
    %367 = vmatprep.subr.mxu0 0.0
    %368 = vmatpush1.msra.mxu0 %v157
    %369 = vmatprep.subr.mxu0 0.0
    %370 = vmatpush2.msra.mxu0 0.0
    %371 = vmatprep.subr.mxu0 0.0
    %372 = vmatpush2.msra.mxu0 0.0
    %373 = vmatprep.subr.mxu0 0.0
    %374 = vmatpush2.msra.mxu0 0.0
    %375 = vmatprep.subr.mxu0 0.0
    %376 = vmatpush2.msra.mxu0 0.0
    %377 = vmatprep.subr.mxu0 0.0
    %378 = vmatpush2.msra.mxu0 0.0
    %379 = vmatprep.subr.mxu0 0.0
    %380 = vmatpush2.msra.mxu0 0.0
    %381 = vmatprep.subr.mxu0 0.0
    %382 = vmatpush2.msra.mxu0 0.0
    %383 = vmatprep.subr.mxu0 0.0
    %384 = vmatpush2.msra.mxu0 0.0
    %385 = vmatprep.subr.mxu0 0.0
    %386 = vmatpush2.msra.mxu0 0.0
    %387 = vmatprep.subr.mxu0 0.0
    %388 = vmatpush2.msra.mxu0 0.0
    %389 = vmatprep.subr.mxu0 0.0
    %390 = vmatpush2.msra.mxu0 0.0
    %391 = vmatprep.subr.mxu0 0.0
    %392 = vmatpush2.msra.mxu0 0.0
    %393 = vmatprep.subr.mxu0 0.0
    %394 = vmatpush2.msra.mxu0 0.0
    %395 = vmatprep.subr.mxu0 0.0
    %396 = vmatpush2.msra.mxu0 0.0
    %397 = vmatprep.subr.mxu0 0.0
    %398 = vmatpush2.msra.mxu0 0.0
    %399 = vmatprep.subr.mxu0 0.0
    %400 = vmatpush2.msra.mxu0 0.0
    %401 = vmatprep.mubr.f32.mxu0 0.0
    %402 = vmatmul.mubr.f32.gmra.mxu0 %v335
    %v403 = vpop.f32.mrf.mxu0
    %v404 = vadd.f32 0.0, %v403
    %v405 = vpop.f32.mrf.mxu0
    %406 = vdwg.mxu0
    %v407 = vadd.f32 %v166, %v404
    %408 = vrot.lane.b32.xlu0 %v149, 120
    %v409 = vpop.permute.xlu0 %408
    %410 = vrot.lane.b32.xlu0 %v149, 88
    %v411 = vpop.permute.xlu0 %410
    %v412 = vsel %vm171, %v409, 0
    %v414 = vsel %vm171, %v411, 0
    %416 = vmatprep.subr.mxu0 0.0
    %417 = vmatpush1.xpose.msra.mxu0 0.0
    %418 = vmatprep.subr.mxu0 0.0
    %419 = vmatpush1.xpose.msra.mxu0 0.0
    %420 = vmatprep.subr.mxu0 0.0
    %421 = vmatpush1.xpose.msra.mxu0 0.0
    %422 = vmatprep.subr.mxu0 0.0
    %423 = vmatpush1.xpose.msra.mxu0 0.0
    %424 = vmatprep.subr.mxu0 0.0
    %425 = vmatpush1.xpose.msra.mxu0 0.0
    %426 = vmatprep.subr.mxu0 0.0
    %427 = vmatpush1.xpose.msra.mxu0 0.0
    %428 = vmatprep.subr.mxu0 0.0
    %429 = vmatpush1.xpose.msra.mxu0 0.0
    %430 = vmatprep.subr.mxu0 0.0
    %431 = vmatpush1.xpose.msra.mxu0 0.0
    %432 = vmatprep.subr.mxu0 0.0
    %433 = vmatpush1.xpose.msra.mxu0 0.0
    %434 = vmatprep.subr.mxu0 0.0
    %435 = vmatpush1.xpose.msra.mxu0 0.0
    %436 = vmatprep.subr.mxu0 0.0
    %437 = vmatpush1.xpose.msra.mxu0 0.0
    %438 = vmatprep.subr.mxu0 0.0
    %439 = vmatpush1.xpose.msra.mxu0 0.0
    %440 = vmatprep.subr.mxu0 0.0
    %441 = vmatpush1.xpose.msra.mxu0 0.0
    %442 = vmatprep.subr.mxu0 0.0
    %443 = vmatpush1.xpose.msra.mxu0 0.0
    %444 = vmatprep.subr.mxu0 0.0
    %445 = vmatpush1.xpose.msra.mxu0 0.0
    %446 = vmatprep.subr.mxu0 0.0
    %447 = vmatpush1.xpose.msra.mxu0 %v414
    %448 = vmatprep.subr.mxu0 0.0
    %449 = vmatpush2.xpose.msra.mxu0 0.0
    %450 = vmatprep.subr.mxu0 0.0
    %451 = vmatpush2.xpose.msra.mxu0 0.0
    %452 = vmatprep.subr.mxu0 0.0
    %453 = vmatpush2.xpose.msra.mxu0 0.0
    %454 = vmatprep.subr.mxu0 0.0
    %455 = vmatpush2.xpose.msra.mxu0 0.0
    %456 = vmatprep.subr.mxu0 0.0
    %457 = vmatpush2.xpose.msra.mxu0 0.0
    %458 = vmatprep.subr.mxu0 0.0
    %459 = vmatpush2.xpose.msra.mxu0 0.0
    %460 = vmatprep.subr.mxu0 0.0
    %461 = vmatpush2.xpose.msra.mxu0 0.0
    %462 = vmatprep.subr.mxu0 0.0
    %463 = vmatpush2.xpose.msra.mxu0 0.0
    %464 = vmatprep.subr.mxu0 0.0
    %465 = vmatpush2.xpose.msra.mxu0 0.0
    %466 = vmatprep.subr.mxu0 0.0
    %467 = vmatpush2.xpose.msra.mxu0 0.0
    %468 = vmatprep.subr.mxu0 0.0
    %469 = vmatpush2.xpose.msra.mxu0 0.0
    %470 = vmatprep.subr.mxu0 0.0
    %471 = vmatpush2.xpose.msra.mxu0 0.0
    %472 = vmatprep.subr.mxu0 0.0
    %473 = vmatpush2.xpose.msra.mxu0 0.0
    %474 = vmatprep.subr.mxu0 0.0
    %475 = vmatpush2.xpose.msra.mxu0 0.0
    %476 = vmatprep.subr.mxu0 0.0
    %477 = vmatpush2.xpose.msra.mxu0 0.0
    %478 = vmatprep.subr.mxu0 0.0
    %479 = vmatpush2.xpose.msra.mxu0 0.0
    %480 = vmatprep.mubr.f32.mxu0 0.0
    %481 = vmatmul.mubr.f32.gmra.mxu0 %v412
    %v482 = vpop.f32.mrf.mxu0
    %v483 = vadd.f32 0.0, %v482
    %v484 = vpop.f32.mrf.mxu0
    %485 = vdwg.mxu0
    %v486 = vmul.f32 %v483, 0.17677669
    %v487 = vsel %vm171, %v486, -inf
    %488 = vmax.xlane.f32.xlu0 %v487
    %v489 = vpop.xlane.xlu0 %488
    %v490 = vsub.f32 %v486, %v489
    %v491 = vmul.f32 %v490, 1.442695
    %v492 = vpow.pop %v491
    %v493 = vsel %vm171, %v492, 0.0
    %494 = vadd.xlane.f32.xlu0 %v493
    %v495 = vpop.xlane.xlu0 %494
    %v496 = vrcp.pop %v495
    %v497 = vmul.f32 %v492, %v496
    %498 = vrot.lane.b32.xlu0 %v149, 56
    %v499 = vpop.permute.xlu0 %498
    %v502 = vsel %vm171, %v497, 0
    %504 = vmatprep.subr.mxu0 0.0
    %505 = vmatpush1.msra.mxu0 0.0
    %506 = vmatprep.subr.mxu0 0.0
    %507 = vmatpush1.msra.mxu0 0.0
    %508 = vmatprep.subr.mxu0 0.0
    %509 = vmatpush1.msra.mxu0 0.0
    %510 = vmatprep.subr.mxu0 0.0
    %511 = vmatpush1.msra.mxu0 0.0
    %512 = vmatprep.subr.mxu0 0.0
    %513 = vmatpush1.msra.mxu0 0.0
    %514 = vmatprep.subr.mxu0 0.0
    %515 = vmatpush1.msra.mxu0 0.0
    %516 = vmatprep.subr.mxu0 0.0
    %517 = vmatpush1.msra.mxu0 0.0
    %518 = vmatprep.subr.mxu0 0.0
    %519 = vmatpush1.msra.mxu0 0.0
    %520 = vmatprep.subr.mxu0 0.0
    %521 = vmatpush1.msra.mxu0 0.0
    %522 = vmatprep.subr.mxu0 0.0
    %523 = vmatpush1.msra.mxu0 0.0
    %524 = vmatprep.subr.mxu0 0.0
    %525 = vmatpush1.msra.mxu0 0.0
    %526 = vmatprep.subr.mxu0 0.0
    %527 = vmatpush1.msra.mxu0 0.0
    %528 = vmatprep.subr.mxu0 0.0
    %529 = vmatpush1.msra.mxu0 0.0
    %530 = vmatprep.subr.mxu0 0.0
    %531 = vmatpush1.msra.mxu0 0.0
    %532 = vmatprep.subr.mxu0 0.0
    %533 = vmatpush1.msra.mxu0 0.0
    %534 = vmatprep.subr.mxu0 0.0
    %535 = vmatpush1.msra.mxu0 %v499
    %536 = vmatprep.subr.mxu0 0.0
    %537 = vmatpush2.msra.mxu0 0.0
    %538 = vmatprep.subr.mxu0 0.0
    %539 = vmatpush2.msra.mxu0 0.0
    %540 = vmatprep.subr.mxu0 0.0
    %541 = vmatpush2.msra.mxu0 0.0
    %542 = vmatprep.subr.mxu0 0.0
    %543 = vmatpush2.msra.mxu0 0.0
    %544 = vmatprep.subr.mxu0 0.0
    %545 = vmatpush2.msra.mxu0 0.0
    %546 = vmatprep.subr.mxu0 0.0
    %547 = vmatpush2.msra.mxu0 0.0
    %548 = vmatprep.subr.mxu0 0.0
    %549 = vmatpush2.msra.mxu0 0.0
    %550 = vmatprep.subr.mxu0 0.0
    %551 = vmatpush2.msra.mxu0 0.0
    %552 = vmatprep.subr.mxu0 0.0
    %553 = vmatpush2.msra.mxu0 0.0
    %554 = vmatprep.subr.mxu0 0.0
    %555 = vmatpush2.msra.mxu0 0.0
    %556 = vmatprep.subr.mxu0 0.0
    %557 = vmatpush2.msra.mxu0 0.0
    %558 = vmatprep.subr.mxu0 0.0
    %559 = vmatpush2.msra.mxu0 0.0
    %560 = vmatprep.subr.mxu0 0.0
    %561 = vmatpush2.msra.mxu0 0.0
    %562 = vmatprep.subr.mxu0 0.0
    %563 = vmatpush2.msra.mxu0 0.0
    %564 = vmatprep.subr.mxu0 0.0
    %565 = vmatpush2.msra.mxu0 0.0
    %566 = vmatprep.subr.mxu0 0.0
    %567 = vmatpush2.msra.mxu0 0.0
    %568 = vmatprep.mubr.f32.mxu0 0.0
    %569 = vmatmul.mubr.f32.gmra.mxu0 %v502
    %v570 = vpop.f32.mrf.mxu0
    %v571 = vadd.f32 0.0, %v570
    %v572 = vpop.f32.mrf.mxu0
    %573 = vdwg.mxu0
    %v575 = vsel %vm171, %v571, 0
    %577 = vmatprep.subr.mxu0 0.0
    %578 = vmatpush1.msra.mxu0 0.0
    %579 = vmatprep.subr.mxu0 0.0
    %580 = vmatpush1.msra.mxu0 0.0
    %581 = vmatprep.subr.mxu0 0.0
    %582 = vmatpush1.msra.mxu0 0.0
    %583 = vmatprep.subr.mxu0 0.0
    %584 = vmatpush1.msra.mxu0 0.0
    %585 = vmatprep.subr.mxu0 0.0
    %586 = vmatpush1.msra.mxu0 0.0
    %587 = vmatprep.subr.mxu0 0.0
    %588 = vmatpush1.msra.mxu0 0.0
    %589 = vmatprep.subr.mxu0 0.0
    %590 = vmatpush1.msra.mxu0 0.0
    %591 = vmatprep.subr.mxu0 0.0
    %592 = vmatpush1.msra.mxu0 0.0
    %593 = vmatprep.subr.mxu0 0.0
    %594 = vmatpush1.msra.mxu0 0.0
    %595 = vmatprep.subr.mxu0 0.0
    %596 = vmatpush1.msra.mxu0 0.0
    %597 = vmatprep.subr.mxu0 0.0
    %598 = vmatpush1.msra.mxu0 0.0
    %599 = vmatprep.subr.mxu0 0.0
    %600 = vmatpush1.msra.mxu0 0.0
    %601 = vmatprep.subr.mxu0 0.0
    %602 = vmatpush1.msra.mxu0 0.0
    %603 = vmatprep.subr.mxu0 0.0
    %604 = vmatpush1.msra.mxu0 0.0
    %605 = vmatprep.subr.mxu0 0.0
    %606 = vmatpush1.msra.mxu0 0.0
    %607 = vmatprep.subr.mxu0 0.0
    %608 = vmatpush1.msra.mxu0 %v158
    %609 = vmatprep.subr.mxu0 0.0
    %610 = vmatpush2.msra.mxu0 0.0
    %611 = vmatprep.subr.mxu0 0.0
    %612 = vmatpush2.msra.mxu0 0.0
    %613 = vmatprep.subr.mxu0 0.0
    %614 = vmatpush2.msra.mxu0 0.0
    %615 = vmatprep.subr.mxu0 0.0
    %616 = vmatpush2.msra.mxu0 0.0
    %617 = vmatprep.subr.mxu0 0.0
    %618 = vmatpush2.msra.mxu0 0.0
    %619 = vmatprep.subr.mxu0 0.0
    %620 = vmatpush2.msra.mxu0 0.0
    %621 = vmatprep.subr.mxu0 0.0
    %622 = vmatpush2.msra.mxu0 0.0
    %623 = vmatprep.subr.mxu0 0.0
    %624 = vmatpush2.msra.mxu0 0.0
    %625 = vmatprep.subr.mxu0 0.0
    %626 = vmatpush2.msra.mxu0 0.0
    %627 = vmatprep.subr.mxu0 0.0
    %628 = vmatpush2.msra.mxu0 0.0
    %629 = vmatprep.subr.mxu0 0.0
    %630 = vmatpush2.msra.mxu0 0.0
    %631 = vmatprep.subr.mxu0 0.0
    %632 = vmatpush2.msra.mxu0 0.0
    %633 = vmatprep.subr.mxu0 0.0
    %634 = vmatpush2.msra.mxu0 0.0
    %635 = vmatprep.subr.mxu0 0.0
    %636 = vmatpush2.msra.mxu0 0.0
    %637 = vmatprep.subr.mxu0 0.0
    %638 = vmatpush2.msra.mxu0 0.0
    %639 = vmatprep.subr.mxu0 0.0
    %640 = vmatpush2.msra.mxu0 0.0
    %641 = vmatprep.mubr.f32.mxu0 0.0
    %642 = vmatmul.mubr.f32.gmra.mxu0 %v575
    %v643 = vpop.f32.mrf.mxu0
    %v644 = vadd.f32 0.0, %v643
    %v645 = vpop.f32.mrf.mxu0
    %646 = vdwg.mxu0
    %v647 = vadd.f32 %v407, %v644
    %648 = vrot.lane.b32.xlu0 %v149, 112
    %v649 = vpop.permute.xlu0 %648
    %650 = vrot.lane.b32.xlu0 %v149, 80
    %v651 = vpop.permute.xlu0 %650
    %v652 = vsel %vm171, %v649, 0
    %v654 = vsel %vm171, %v651, 0
    %656 = vmatprep.subr.mxu0 0.0
    %657 = vmatpush1.xpose.msra.mxu0 0.0
    %658 = vmatprep.subr.mxu0 0.0
    %659 = vmatpush1.xpose.msra.mxu0 0.0
    %660 = vmatprep.subr.mxu0 0.0
    %661 = vmatpush1.xpose.msra.mxu0 0.0
    %662 = vmatprep.subr.mxu0 0.0
    %663 = vmatpush1.xpose.msra.mxu0 0.0
    %664 = vmatprep.subr.mxu0 0.0
    %665 = vmatpush1.xpose.msra.mxu0 0.0
    %666 = vmatprep.subr.mxu0 0.0
    %667 = vmatpush1.xpose.msra.mxu0 0.0
    %668 = vmatprep.subr.mxu0 0.0
    %669 = vmatpush1.xpose.msra.mxu0 0.0
    %670 = vmatprep.subr.mxu0 0.0
    %671 = vmatpush1.xpose.msra.mxu0 0.0
    %672 = vmatprep.subr.mxu0 0.0
    %673 = vmatpush1.xpose.msra.mxu0 0.0
    %674 = vmatprep.subr.mxu0 0.0
    %675 = vmatpush1.xpose.msra.mxu0 0.0
    %676 = vmatprep.subr.mxu0 0.0
    %677 = vmatpush1.xpose.msra.mxu0 0.0
    %678 = vmatprep.subr.mxu0 0.0
    %679 = vmatpush1.xpose.msra.mxu0 0.0
    %680 = vmatprep.subr.mxu0 0.0
    %681 = vmatpush1.xpose.msra.mxu0 0.0
    %682 = vmatprep.subr.mxu0 0.0
    %683 = vmatpush1.xpose.msra.mxu0 0.0
    %684 = vmatprep.subr.mxu0 0.0
    %685 = vmatpush1.xpose.msra.mxu0 0.0
    %686 = vmatprep.subr.mxu0 0.0
    %687 = vmatpush1.xpose.msra.mxu0 %v654
    %688 = vmatprep.subr.mxu0 0.0
    %689 = vmatpush2.xpose.msra.mxu0 0.0
    %690 = vmatprep.subr.mxu0 0.0
    %691 = vmatpush2.xpose.msra.mxu0 0.0
    %692 = vmatprep.subr.mxu0 0.0
    %693 = vmatpush2.xpose.msra.mxu0 0.0
    %694 = vmatprep.subr.mxu0 0.0
    %695 = vmatpush2.xpose.msra.mxu0 0.0
    %696 = vmatprep.subr.mxu0 0.0
    %697 = vmatpush2.xpose.msra.mxu0 0.0
    %698 = vmatprep.subr.mxu0 0.0
    %699 = vmatpush2.xpose.msra.mxu0 0.0
    %700 = vmatprep.subr.mxu0 0.0
    %701 = vmatpush2.xpose.msra.mxu0 0.0
    %702 = vmatprep.subr.mxu0 0.0
    %703 = vmatpush2.xpose.msra.mxu0 0.0
    %704 = vmatprep.subr.mxu0 0.0
    %705 = vmatpush2.xpose.msra.mxu0 0.0
    %706 = vmatprep.subr.mxu0 0.0
    %707 = vmatpush2.xpose.msra.mxu0 0.0
    %708 = vmatprep.subr.mxu0 0.0
    %709 = vmatpush2.xpose.msra.mxu0 0.0
    %710 = vmatprep.subr.mxu0 0.0
    %711 = vmatpush2.xpose.msra.mxu0 0.0
    %712 = vmatprep.subr.mxu0 0.0
    %713 = vmatpush2.xpose.msra.mxu0 0.0
    %714 = vmatprep.subr.mxu0 0.0
    %715 = vmatpush2.xpose.msra.mxu0 0.0
    %716 = vmatprep.subr.mxu0 0.0
    %717 = vmatpush2.xpose.msra.mxu0 0.0
    %718 = vmatprep.subr.mxu0 0.0
    %719 = vmatpush2.xpose.msra.mxu0 0.0
    %720 = vmatprep.mubr.f32.mxu0 0.0
    %721 = vmatmul.mubr.f32.gmra.mxu0 %v652
    %v722 = vpop.f32.mrf.mxu0
    %v723 = vadd.f32 0.0, %v722
    %v724 = vpop.f32.mrf.mxu0
    %725 = vdwg.mxu0
    %v726 = vmul.f32 %v723, 0.17677669
    %v727 = vsel %vm171, %v726, -inf
    %728 = vmax.xlane.f32.xlu0 %v727
    %v729 = vpop.xlane.xlu0 %728
    %v730 = vsub.f32 %v726, %v729
    %v731 = vmul.f32 %v730, 1.442695
    %v732 = vpow.pop %v731
    %v733 = vsel %vm171, %v732, 0.0
    %734 = vadd.xlane.f32.xlu0 %v733
    %v735 = vpop.xlane.xlu0 %734
    %v736 = vrcp.pop %v735
    %v737 = vmul.f32 %v732, %v736
    %738 = vrot.lane.b32.xlu0 %v149, 48
    %v739 = vpop.permute.xlu0 %738
    %v742 = vsel %vm171, %v737, 0
    %744 = vmatprep.subr.mxu0 0.0
    %745 = vmatpush1.msra.mxu0 0.0
    %746 = vmatprep.subr.mxu0 0.0
    %747 = vmatpush1.msra.mxu0 0.0
    %748 = vmatprep.subr.mxu0 0.0
    %749 = vmatpush1.msra.mxu0 0.0
    %750 = vmatprep.subr.mxu0 0.0
    %751 = vmatpush1.msra.mxu0 0.0
    %752 = vmatprep.subr.mxu0 0.0
    %753 = vmatpush1.msra.mxu0 0.0
    %754 = vmatprep.subr.mxu0 0.0
    %755 = vmatpush1.msra.mxu0 0.0
    %756 = vmatprep.subr.mxu0 0.0
    %757 = vmatpush1.msra.mxu0 0.0
    %758 = vmatprep.subr.mxu0 0.0
    %759 = vmatpush1.msra.mxu0 0.0
    %760 = vmatprep.subr.mxu0 0.0
    %761 = vmatpush1.msra.mxu0 0.0
    %762 = vmatprep.subr.mxu0 0.0
    %763 = vmatpush1.msra.mxu0 0.0
    %764 = vmatprep.subr.mxu0 0.0
    %765 = vmatpush1.msra.mxu0 0.0
    %766 = vmatprep.subr.mxu0 0.0
    %767 = vmatpush1.msra.mxu0 0.0
    %768 = vmatprep.subr.mxu0 0.0
    %769 = vmatpush1.msra.mxu0 0.0
    %770 = vmatprep.subr.mxu0 0.0
    %771 = vmatpush1.msra.mxu0 0.0
    %772 = vmatprep.subr.mxu0 0.0
    %773 = vmatpush1.msra.mxu0 0.0
    %774 = vmatprep.subr.mxu0 0.0
    %775 = vmatpush1.msra.mxu0 %v739
    %776 = vmatprep.subr.mxu0 0.0
    %777 = vmatpush2.msra.mxu0 0.0
    %778 = vmatprep.subr.mxu0 0.0
    %779 = vmatpush2.msra.mxu0 0.0
    %780 = vmatprep.subr.mxu0 0.0
    %781 = vmatpush2.msra.mxu0 0.0
    %782 = vmatprep.subr.mxu0 0.0
    %783 = vmatpush2.msra.mxu0 0.0
    %784 = vmatprep.subr.mxu0 0.0
    %785 = vmatpush2.msra.mxu0 0.0
    %786 = vmatprep.subr.mxu0 0.0
    %787 = vmatpush2.msra.mxu0 0.0
    %788 = vmatprep.subr.mxu0 0.0
    %789 = vmatpush2.msra.mxu0 0.0
    %790 = vmatprep.subr.mxu0 0.0
    %791 = vmatpush2.msra.mxu0 0.0
    %792 = vmatprep.subr.mxu0 0.0
    %793 = vmatpush2.msra.mxu0 0.0
    %794 = vmatprep.subr.mxu0 0.0
    %795 = vmatpush2.msra.mxu0 0.0
    %796 = vmatprep.subr.mxu0 0.0
    %797 = vmatpush2.msra.mxu0 0.0
    %798 = vmatprep.subr.mxu0 0.0
    %799 = vmatpush2.msra.mxu0 0.0
    %800 = vmatprep.subr.mxu0 0.0
    %801 = vmatpush2.msra.mxu0 0.0
    %802 = vmatprep.subr.mxu0 0.0
    %803 = vmatpush2.msra.mxu0 0.0
    %804 = vmatprep.subr.mxu0 0.0
    %805 = vmatpush2.msra.mxu0 0.0
    %806 = vmatprep.subr.mxu0 0.0
    %807 = vmatpush2.msra.mxu0 0.0
    %808 = vmatprep.mubr.f32.mxu0 0.0
    %809 = vmatmul.mubr.f32.gmra.mxu0 %v742
    %v810 = vpop.f32.mrf.mxu0
    %v811 = vadd.f32 0.0, %v810
    %v812 = vpop.f32.mrf.mxu0
    %813 = vdwg.mxu0
    %v815 = vsel %vm171, %v811, 0
    %817 = vmatprep.subr.mxu0 0.0
    %818 = vmatpush1.msra.mxu0 0.0
    %819 = vmatprep.subr.mxu0 0.0
    %820 = vmatpush1.msra.mxu0 0.0
    %821 = vmatprep.subr.mxu0 0.0
    %822 = vmatpush1.msra.mxu0 0.0
    %823 = vmatprep.subr.mxu0 0.0
    %824 = vmatpush1.msra.mxu0 0.0
    %825 = vmatprep.subr.mxu0 0.0
    %826 = vmatpush1.msra.mxu0 0.0
    %827 = vmatprep.subr.mxu0 0.0
    %828 = vmatpush1.msra.mxu0 0.0
    %829 = vmatprep.subr.mxu0 0.0
    %830 = vmatpush1.msra.mxu0 0.0
    %831 = vmatprep.subr.mxu0 0.0
    %832 = vmatpush1.msra.mxu0 0.0
    %833 = vmatprep.subr.mxu0 0.0
    %834 = vmatpush1.msra.mxu0 0.0
    %835 = vmatprep.subr.mxu0 0.0
    %836 = vmatpush1.msra.mxu0 0.0
    %837 = vmatprep.subr.mxu0 0.0
    %838 = vmatpush1.msra.mxu0 0.0
    %839 = vmatprep.subr.mxu0 0.0
    %840 = vmatpush1.msra.mxu0 0.0
    %841 = vmatprep.subr.mxu0 0.0
    %842 = vmatpush1.msra.mxu0 0.0
    %843 = vmatprep.subr.mxu0 0.0
    %844 = vmatpush1.msra.mxu0 0.0
    %845 = vmatprep.subr.mxu0 0.0
    %846 = vmatpush1.msra.mxu0 0.0
    %847 = vmatprep.subr.mxu0 0.0
    %848 = vmatpush1.msra.mxu0 %v159
    %849 = vmatprep.subr.mxu0 0.0
    %850 = vmatpush2.msra.mxu0 0.0
    %851 = vmatprep.subr.mxu0 0.0
    %852 = vmatpush2.msra.mxu0 0.0
    %853 = vmatprep.subr.mxu0 0.0
    %854 = vmatpush2.msra.mxu0 0.0
    %855 = vmatprep.subr.mxu0 0.0
    %856 = vmatpush2.msra.mxu0 0.0
    %857 = vmatprep.subr.mxu0 0.0
    %858 = vmatpush2.msra.mxu0 0.0
    %859 = vmatprep.subr.mxu0 0.0
    %860 = vmatpush2.msra.mxu0 0.0
    %861 = vmatprep.subr.mxu0 0.0
    %862 = vmatpush2.msra.mxu0 0.0
    %863 = vmatprep.subr.mxu0 0.0
    %864 = vmatpush2.msra.mxu0 0.0
    %865 = vmatprep.subr.mxu0 0.0
    %866 = vmatpush2.msra.mxu0 0.0
    %867 = vmatprep.subr.mxu0 0.0
    %868 = vmatpush2.msra.mxu0 0.0
    %869 = vmatprep.subr.mxu0 0.0
    %870 = vmatpush2.msra.mxu0 0.0
    %871 = vmatprep.subr.mxu0 0.0
    %872 = vmatpush2.msra.mxu0 0.0
    %873 = vmatprep.subr.mxu0 0.0
    %874 = vmatpush2.msra.mxu0 0.0
    %875 = vmatprep.subr.mxu0 0.0
    %876 = vmatpush2.msra.mxu0 0.0
    %877 = vmatprep.subr.mxu0 0.0
    %878 = vmatpush2.msra.mxu0 0.0
    %879 = vmatprep.subr.mxu0 0.0
    %880 = vmatpush2.msra.mxu0 0.0
    %881 = vmatprep.mubr.f32.mxu0 0.0
    %882 = vmatmul.mubr.f32.gmra.mxu0 %v815
    %v883 = vpop.f32.mrf.mxu0
    %v884 = vadd.f32 0.0, %v883
    %v885 = vpop.f32.mrf.mxu0
    %886 = vdwg.mxu0
    %v887 = vadd.f32 %v647, %v884
    %888 = vrot.lane.b32.xlu0 %v149, 104
    %v889 = vpop.permute.xlu0 %888
    %890 = vrot.lane.b32.xlu0 %v149, 72
    %v891 = vpop.permute.xlu0 %890
    %v892 = vsel %vm171, %v889, 0
    %v894 = vsel %vm171, %v891, 0
    %896 = vmatprep.subr.mxu0 0.0
    %897 = vmatpush1.xpose.msra.mxu0 0.0
    %898 = vmatprep.subr.mxu0 0.0
    %899 = vmatpush1.xpose.msra.mxu0 0.0
    %900 = vmatprep.subr.mxu0 0.0
    %901 = vmatpush1.xpose.msra.mxu0 0.0
    %902 = vmatprep.subr.mxu0 0.0
    %903 = vmatpush1.xpose.msra.mxu0 0.0
    %904 = vmatprep.subr.mxu0 0.0
    %905 = vmatpush1.xpose.msra.mxu0 0.0
    %906 = vmatprep.subr.mxu0 0.0
    %907 = vmatpush1.xpose.msra.mxu0 0.0
    %908 = vmatprep.subr.mxu0 0.0
    %909 = vmatpush1.xpose.msra.mxu0 0.0
    %910 = vmatprep.subr.mxu0 0.0
    %911 = vmatpush1.xpose.msra.mxu0 0.0
    %912 = vmatprep.subr.mxu0 0.0
    %913 = vmatpush1.xpose.msra.mxu0 0.0
    %914 = vmatprep.subr.mxu0 0.0
    %915 = vmatpush1.xpose.msra.mxu0 0.0
    %916 = vmatprep.subr.mxu0 0.0
    %917 = vmatpush1.xpose.msra.mxu0 0.0
    %918 = vmatprep.subr.mxu0 0.0
    %919 = vmatpush1.xpose.msra.mxu0 0.0
    %920 = vmatprep.subr.mxu0 0.0
    %921 = vmatpush1.xpose.msra.mxu0 0.0
    %922 = vmatprep.subr.mxu0 0.0
    %923 = vmatpush1.xpose.msra.mxu0 0.0
    %924 = vmatprep.subr.mxu0 0.0
    %925 = vmatpush1.xpose.msra.mxu0 0.0
    %926 = vmatprep.subr.mxu0 0.0
    %927 = vmatpush1.xpose.msra.mxu0 %v894
    %928 = vmatprep.subr.mxu0 0.0
    %929 = vmatpush2.xpose.msra.mxu0 0.0
    %930 = vmatprep.subr.mxu0 0.0
    %931 = vmatpush2.xpose.msra.mxu0 0.0
    %932 = vmatprep.subr.mxu0 0.0
    %933 = vmatpush2.xpose.msra.mxu0 0.0
    %934 = vmatprep.subr.mxu0 0.0
    %935 = vmatpush2.xpose.msra.mxu0 0.0
    %936 = vmatprep.subr.mxu0 0.0
    %937 = vmatpush2.xpose.msra.mxu0 0.0
    %938 = vmatprep.subr.mxu0 0.0
    %939 = vmatpush2.xpose.msra.mxu0 0.0
    %940 = vmatprep.subr.mxu0 0.0
    %941 = vmatpush2.xpose.msra.mxu0 0.0
    %942 = vmatprep.subr.mxu0 0.0
    %943 = vmatpush2.xpose.msra.mxu0 0.0
    %944 = vmatprep.subr.mxu0 0.0
    %945 = vmatpush2.xpose.msra.mxu0 0.0
    %946 = vmatprep.subr.mxu0 0.0
    %947 = vmatpush2.xpose.msra.mxu0 0.0
    %948 = vmatprep.subr.mxu0 0.0
    %949 = vmatpush2.xpose.msra.mxu0 0.0
    %950 = vmatprep.subr.mxu0 0.0
    %951 = vmatpush2.xpose.msra.mxu0 0.0
    %952 = vmatprep.subr.mxu0 0.0
    %953 = vmatpush2.xpose.msra.mxu0 0.0
    %954 = vmatprep.subr.mxu0 0.0
    %955 = vmatpush2.xpose.msra.mxu0 0.0
    %956 = vmatprep.subr.mxu0 0.0
    %957 = vmatpush2.xpose.msra.mxu0 0.0
    %958 = vmatprep.subr.mxu0 0.0
    %959 = vmatpush2.xpose.msra.mxu0 0.0
    %960 = vmatprep.mubr.f32.mxu0 0.0
    %961 = vmatmul.mubr.f32.gmra.mxu0 %v892
    %v962 = vpop.f32.mrf.mxu0
    %v963 = vadd.f32 0.0, %v962
    %v964 = vpop.f32.mrf.mxu0
    %965 = vdwg.mxu0
    %v966 = vmul.f32 %v963, 0.17677669
    %v967 = vsel %vm171, %v966, -inf
    %968 = vmax.xlane.f32.xlu0 %v967
    %v969 = vpop.xlane.xlu0 %968
    %v970 = vsub.f32 %v966, %v969
    %v971 = vmul.f32 %v970, 1.442695
    %v972 = vpow.pop %v971
    %v973 = vsel %vm171, %v972, 0.0
    %974 = vadd.xlane.f32.xlu0 %v973
    %v975 = vpop.xlane.xlu0 %974
    %v976 = vrcp.pop %v975
    %v977 = vmul.f32 %v972, %v976
    %978 = vrot.lane.b32.xlu0 %v149, 40
    %v979 = vpop.permute.xlu0 %978
    %v982 = vsel %vm171, %v977, 0
    %984 = vmatprep.subr.mxu0 0.0
    %985 = vmatpush1.msra.mxu0 0.0
    %986 = vmatprep.subr.mxu0 0.0
    %987 = vmatpush1.msra.mxu0 0.0
    %988 = vmatprep.subr.mxu0 0.0
    %989 = vmatpush1.msra.mxu0 0.0
    %990 = vmatprep.subr.mxu0 0.0
    %991 = vmatpush1.msra.mxu0 0.0
    %992 = vmatprep.subr.mxu0 0.0
    %993 = vmatpush1.msra.mxu0 0.0
    %994 = vmatprep.subr.mxu0 0.0
    %995 = vmatpush1.msra.mxu0 0.0
    %996 = vmatprep.subr.mxu0 0.0
    %997 = vmatpush1.msra.mxu0 0.0
    %998 = vmatprep.subr.mxu0 0.0
    %999 = vmatpush1.msra.mxu0 0.0
    %1000 = vmatprep.subr.mxu0 0.0
    %1001 = vmatpush1.msra.mxu0 0.0
    %1002 = vmatprep.subr.mxu0 0.0
    %1003 = vmatpush1.msra.mxu0 0.0
    %1004 = vmatprep.subr.mxu0 0.0
    %1005 = vmatpush1.msra.mxu0 0.0
    %1006 = vmatprep.subr.mxu0 0.0
    %1007 = vmatpush1.msra.mxu0 0.0
    %1008 = vmatprep.subr.mxu0 0.0
    %1009 = vmatpush1.msra.mxu0 0.0
    %1010 = vmatprep.subr.mxu0 0.0
    %1011 = vmatpush1.msra.mxu0 0.0
    %1012 = vmatprep.subr.mxu0 0.0
    %1013 = vmatpush1.msra.mxu0 0.0
    %1014 = vmatprep.subr.mxu0 0.0
    %1015 = vmatpush1.msra.mxu0 %v979
    %1016 = vmatprep.subr.mxu0 0.0
    %1017 = vmatpush2.msra.mxu0 0.0
    %1018 = vmatprep.subr.mxu0 0.0
    %1019 = vmatpush2.msra.mxu0 0.0
    %1020 = vmatprep.subr.mxu0 0.0
    %1021 = vmatpush2.msra.mxu0 0.0
    %1022 = vmatprep.subr.mxu0 0.0
    %1023 = vmatpush2.msra.mxu0 0.0
    %1024 = vmatprep.subr.mxu0 0.0
    %1025 = vmatpush2.msra.mxu0 0.0
    %1026 = vmatprep.subr.mxu0 0.0
    %1027 = vmatpush2.msra.mxu0 0.0
    %1028 = vmatprep.subr.mxu0 0.0
    %1029 = vmatpush2.msra.mxu0 0.0
    %1030 = vmatprep.subr.mxu0 0.0
    %1031 = vmatpush2.msra.mxu0 0.0
    %1032 = vmatprep.subr.mxu0 0.0
    %1033 = vmatpush2.msra.mxu0 0.0
    %1034 = vmatprep.subr.mxu0 0.0
    %1035 = vmatpush2.msra.mxu0 0.0
    %1036 = vmatprep.subr.mxu0 0.0
    %1037 = vmatpush2.msra.mxu0 0.0
    %1038 = vmatprep.subr.mxu0 0.0
    %1039 = vmatpush2.msra.mxu0 0.0
    %1040 = vmatprep.subr.mxu0 0.0
    %1041 = vmatpush2.msra.mxu0 0.0
    %1042 = vmatprep.subr.mxu0 0.0
    %1043 = vmatpush2.msra.mxu0 0.0
    %1044 = vmatprep.subr.mxu0 0.0
    %1045 = vmatpush2.msra.mxu0 0.0
    %1046 = vmatprep.subr.mxu0 0.0
    %1047 = vmatpush2.msra.mxu0 0.0
    %1048 = vmatprep.mubr.f32.mxu0 0.0
    %1049 = vmatmul.mubr.f32.gmra.mxu0 %v982
    %v1050 = vpop.f32.mrf.mxu0
    %v1051 = vadd.f32 0.0, %v1050
    %v1052 = vpop.f32.mrf.mxu0
    %1053 = vdwg.mxu0
    %v1055 = vsel %vm171, %v1051, 0
    %1057 = vmatprep.subr.mxu0 0.0
    %1058 = vmatpush1.msra.mxu0 0.0
    %1059 = vmatprep.subr.mxu0 0.0
    %1060 = vmatpush1.msra.mxu0 0.0
    %1061 = vmatprep.subr.mxu0 0.0
    %1062 = vmatpush1.msra.mxu0 0.0
    %1063 = vmatprep.subr.mxu0 0.0
    %1064 = vmatpush1.msra.mxu0 0.0
    %1065 = vmatprep.subr.mxu0 0.0
    %1066 = vmatpush1.msra.mxu0 0.0
    %1067 = vmatprep.subr.mxu0 0.0
    %1068 = vmatpush1.msra.mxu0 0.0
    %1069 = vmatprep.subr.mxu0 0.0
    %1070 = vmatpush1.msra.mxu0 0.0
    %1071 = vmatprep.subr.mxu0 0.0
    %1072 = vmatpush1.msra.mxu0 0.0
    %1073 = vmatprep.subr.mxu0 0.0
    %1074 = vmatpush1.msra.mxu0 0.0
    %1075 = vmatprep.subr.mxu0 0.0
    %1076 = vmatpush1.msra.mxu0 0.0
    %1077 = vmatprep.subr.mxu0 0.0
    %1078 = vmatpush1.msra.mxu0 0.0
    %1079 = vmatprep.subr.mxu0 0.0
    %1080 = vmatpush1.msra.mxu0 0.0
    %1081 = vmatprep.subr.mxu0 0.0
    %1082 = vmatpush1.msra.mxu0 0.0
    %1083 = vmatprep.subr.mxu0 0.0
    %1084 = vmatpush1.msra.mxu0 0.0
    %1085 = vmatprep.subr.mxu0 0.0
    %1086 = vmatpush1.msra.mxu0 0.0
    %1087 = vmatprep.subr.mxu0 0.0
    %1088 = vmatpush1.msra.mxu0 %v160
    %1089 = vmatprep.subr.mxu0 0.0
    %1090 = vmatpush2.msra.mxu0 0.0
    %1091 = vmatprep.subr.mxu0 0.0
    %1092 = vmatpush2.msra.mxu0 0.0
    %1093 = vmatprep.subr.mxu0 0.0
    %1094 = vmatpush2.msra.mxu0 0.0
    %1095 = vmatprep.subr.mxu0 0.0
    %1096 = vmatpush2.msra.mxu0 0.0
    %1097 = vmatprep.subr.mxu0 0.0
    %1098 = vmatpush2.msra.mxu0 0.0
    %1099 = vmatprep.subr.mxu0 0.0
    %1100 = vmatpush2.msra.mxu0 0.0
    %1101 = vmatprep.subr.mxu0 0.0
    %1102 = vmatpush2.msra.mxu0 0.0
    %1103 = vmatprep.subr.mxu0 0.0
    %1104 = vmatpush2.msra.mxu0 0.0
    %1105 = vmatprep.subr.mxu0 0.0
    %1106 = vmatpush2.msra.mxu0 0.0
    %1107 = vmatprep.subr.mxu0 0.0
    %1108 = vmatpush2.msra.mxu0 0.0
    %1109 = vmatprep.subr.mxu0 0.0
    %1110 = vmatpush2.msra.mxu0 0.0
    %1111 = vmatprep.subr.mxu0 0.0
    %1112 = vmatpush2.msra.mxu0 0.0
    %1113 = vmatprep.subr.mxu0 0.0
    %1114 = vmatpush2.msra.mxu0 0.0
    %1115 = vmatprep.subr.mxu0 0.0
    %1116 = vmatpush2.msra.mxu0 0.0
    %1117 = vmatprep.subr.mxu0 0.0
    %1118 = vmatpush2.msra.mxu0 0.0
    %1119 = vmatprep.subr.mxu0 0.0
    %1120 = vmatpush2.msra.mxu0 0.0
    %1121 = vmatprep.mubr.f32.mxu0 0.0
    %1122 = vmatmul.mubr.f32.gmra.mxu0 %v1055
    %v1123 = vpop.f32.mrf.mxu0
    %v1124 = vadd.f32 0.0, %v1123
    %v1125 = vpop.f32.mrf.mxu0
    %1126 = vdwg.mxu0
    %v1127 = vadd.f32 %v887, %v1124
    %1128 = vst.msk [vmem:[#allocation8] sm:$0xff] %vm75, %v1127
    %1130 = vrot.lane.b32.xlu0 %v154, 96
    %v1131 = vpop.permute.xlu0 %1130
    %v1132 = vsel %vm171, %v154, 0
    %v1134 = vsel %vm171, %v1131, 0
    %1136 = vmatprep.subr.mxu0 0.0
    %1137 = vmatpush1.xpose.msra.mxu0 0.0
    %1138 = vmatprep.subr.mxu0 0.0
    %1139 = vmatpush1.xpose.msra.mxu0 0.0
    %1140 = vmatprep.subr.mxu0 0.0
    %1141 = vmatpush1.xpose.msra.mxu0 0.0
    %1142 = vmatprep.subr.mxu0 0.0
    %1143 = vmatpush1.xpose.msra.mxu0 0.0
    %1144 = vmatprep.subr.mxu0 0.0
    %1145 = vmatpush1.xpose.msra.mxu0 0.0
    %1146 = vmatprep.subr.mxu0 0.0
    %1147 = vmatpush1.xpose.msra.mxu0 0.0
    %1148 = vmatprep.subr.mxu0 0.0
    %1149 = vmatpush1.xpose.msra.mxu0 0.0
    %1150 = vmatprep.subr.mxu0 0.0
    %1151 = vmatpush1.xpose.msra.mxu0 0.0
    %1152 = vmatprep.subr.mxu0 0.0
    %1153 = vmatpush1.xpose.msra.mxu0 0.0
    %1154 = vmatprep.subr.mxu0 0.0
    %1155 = vmatpush1.xpose.msra.mxu0 0.0
    %1156 = vmatprep.subr.mxu0 0.0
    %1157 = vmatpush1.xpose.msra.mxu0 0.0
    %1158 = vmatprep.subr.mxu0 0.0
    %1159 = vmatpush1.xpose.msra.mxu0 0.0
    %1160 = vmatprep.subr.mxu0 0.0
    %1161 = vmatpush1.xpose.msra.mxu0 0.0
    %1162 = vmatprep.subr.mxu0 0.0
    %1163 = vmatpush1.xpose.msra.mxu0 0.0
    %1164 = vmatprep.subr.mxu0 0.0
    %1165 = vmatpush1.xpose.msra.mxu0 0.0
    %1166 = vmatprep.subr.mxu0 0.0
    %1167 = vmatpush1.xpose.msra.mxu0 %v1134
    %1168 = vmatprep.subr.mxu0 0.0
    %1169 = vmatpush2.xpose.msra.mxu0 0.0
    %1170 = vmatprep.subr.mxu0 0.0
    %1171 = vmatpush2.xpose.msra.mxu0 0.0
    %1172 = vmatprep.subr.mxu0 0.0
    %1173 = vmatpush2.xpose.msra.mxu0 0.0
    %1174 = vmatprep.subr.mxu0 0.0
    %1175 = vmatpush2.xpose.msra.mxu0 0.0
    %1176 = vmatprep.subr.mxu0 0.0
    %1177 = vmatpush2.xpose.msra.mxu0 0.0
    %1178 = vmatprep.subr.mxu0 0.0
    %1179 = vmatpush2.xpose.msra.mxu0 0.0
    %1180 = vmatprep.subr.mxu0 0.0
    %1181 = vmatpush2.xpose.msra.mxu0 0.0
    %1182 = vmatprep.subr.mxu0 0.0
    %1183 = vmatpush2.xpose.msra.mxu0 0.0
    %1184 = vmatprep.subr.mxu0 0.0
    %1185 = vmatpush2.xpose.msra.mxu0 0.0
    %1186 = vmatprep.subr.mxu0 0.0
    %1187 = vmatpush2.xpose.msra.mxu0 0.0
    %1188 = vmatprep.subr.mxu0 0.0
    %1189 = vmatpush2.xpose.msra.mxu0 0.0
    %1190 = vmatprep.subr.mxu0 0.0
    %1191 = vmatpush2.xpose.msra.mxu0 0.0
    %1192 = vmatprep.subr.mxu0 0.0
    %1193 = vmatpush2.xpose.msra.mxu0 0.0
    %1194 = vmatprep.subr.mxu0 0.0
    %1195 = vmatpush2.xpose.msra.mxu0 0.0
    %1196 = vmatprep.subr.mxu0 0.0
    %1197 = vmatpush2.xpose.msra.mxu0 0.0
    %1198 = vmatprep.subr.mxu0 0.0
    %1199 = vmatpush2.xpose.msra.mxu0 0.0
    %1200 = vmatprep.mubr.f32.mxu0 0.0
    %1201 = vmatmul.mubr.f32.gmra.mxu0 %v1132
    %v1202 = vpop.f32.mrf.mxu0
    %v1203 = vadd.f32 0.0, %v1202
    %v1204 = vpop.f32.mrf.mxu0
    %1205 = vdwg.mxu0
    %v1206 = vmul.f32 %v1203, 0.17677669
    %v1207 = vsel %vm171, %v1206, -inf
    %1208 = vmax.xlane.f32.xlu0 %v1207
    %v1209 = vpop.xlane.xlu0 %1208
    %v1210 = vsub.f32 %v1206, %v1209
    %v1211 = vmul.f32 %v1210, 1.442695
    %v1212 = vpow.pop %v1211
    %v1213 = vsel %vm171, %v1212, 0.0
    %1214 = vadd.xlane.f32.xlu0 %v1213
    %v1215 = vpop.xlane.xlu0 %1214
    %v1216 = vrcp.pop %v1215
    %v1217 = vmul.f32 %v1212, %v1216
    %1218 = vrot.lane.b32.xlu0 %v154, 64
    %v1219 = vpop.permute.xlu0 %1218
    %v1222 = vsel %vm171, %v1217, 0
    %1224 = vmatprep.subr.mxu0 0.0
    %1225 = vmatpush1.msra.mxu0 0.0
    %1226 = vmatprep.subr.mxu0 0.0
    %1227 = vmatpush1.msra.mxu0 0.0
    %1228 = vmatprep.subr.mxu0 0.0
    %1229 = vmatpush1.msra.mxu0 0.0
    %1230 = vmatprep.subr.mxu0 0.0
    %1231 = vmatpush1.msra.mxu0 0.0
    %1232 = vmatprep.subr.mxu0 0.0
    %1233 = vmatpush1.msra.mxu0 0.0
    %1234 = vmatprep.subr.mxu0 0.0
    %1235 = vmatpush1.msra.mxu0 0.0
    %1236 = vmatprep.subr.mxu0 0.0
    %1237 = vmatpush1.msra.mxu0 0.0
    %1238 = vmatprep.subr.mxu0 0.0
    %1239 = vmatpush1.msra.mxu0 0.0
    %1240 = vmatprep.subr.mxu0 0.0
    %1241 = vmatpush1.msra.mxu0 0.0
    %1242 = vmatprep.subr.mxu0 0.0
    %1243 = vmatpush1.msra.mxu0 0.0
    %1244 = vmatprep.subr.mxu0 0.0
    %1245 = vmatpush1.msra.mxu0 0.0
    %1246 = vmatprep.subr.mxu0 0.0
    %1247 = vmatpush1.msra.mxu0 0.0
    %1248 = vmatprep.subr.mxu0 0.0
    %1249 = vmatpush1.msra.mxu0 0.0
    %1250 = vmatprep.subr.mxu0 0.0
    %1251 = vmatpush1.msra.mxu0 0.0
    %1252 = vmatprep.subr.mxu0 0.0
    %1253 = vmatpush1.msra.mxu0 0.0
    %1254 = vmatprep.subr.mxu0 0.0
    %1255 = vmatpush1.msra.mxu0 %v1219
    %1256 = vmatprep.subr.mxu0 0.0
    %1257 = vmatpush2.msra.mxu0 0.0
    %1258 = vmatprep.subr.mxu0 0.0
    %1259 = vmatpush2.msra.mxu0 0.0
    %1260 = vmatprep.subr.mxu0 0.0
    %1261 = vmatpush2.msra.mxu0 0.0
    %1262 = vmatprep.subr.mxu0 0.0
    %1263 = vmatpush2.msra.mxu0 0.0
    %1264 = vmatprep.subr.mxu0 0.0
    %1265 = vmatpush2.msra.mxu0 0.0
    %1266 = vmatprep.subr.mxu0 0.0
    %1267 = vmatpush2.msra.mxu0 0.0
    %1268 = vmatprep.subr.mxu0 0.0
    %1269 = vmatpush2.msra.mxu0 0.0
    %1270 = vmatprep.subr.mxu0 0.0
    %1271 = vmatpush2.msra.mxu0 0.0
    %1272 = vmatprep.subr.mxu0 0.0
    %1273 = vmatpush2.msra.mxu0 0.0
    %1274 = vmatprep.subr.mxu0 0.0
    %1275 = vmatpush2.msra.mxu0 0.0
    %1276 = vmatprep.subr.mxu0 0.0
    %1277 = vmatpush2.msra.mxu0 0.0
    %1278 = vmatprep.subr.mxu0 0.0
    %1279 = vmatpush2.msra.mxu0 0.0
    %1280 = vmatprep.subr.mxu0 0.0
    %1281 = vmatpush2.msra.mxu0 0.0
    %1282 = vmatprep.subr.mxu0 0.0
    %1283 = vmatpush2.msra.mxu0 0.0
    %1284 = vmatprep.subr.mxu0 0.0
    %1285 = vmatpush2.msra.mxu0 0.0
    %1286 = vmatprep.subr.mxu0 0.0
    %1287 = vmatpush2.msra.mxu0 0.0
    %1288 = vmatprep.mubr.f32.mxu0 0.0
    %1289 = vmatmul.mubr.f32.gmra.mxu0 %v1222
    %v1290 = vpop.f32.mrf.mxu0
    %v1291 = vadd.f32 0.0, %v1290
    %v1292 = vpop.f32.mrf.mxu0
    %1293 = vdwg.mxu0
    %v1295 = vsel %vm171, %v1291, 0
    %1297 = vmatprep.subr.mxu0 0.0
    %1298 = vmatpush1.msra.mxu0 0.0
    %1299 = vmatprep.subr.mxu0 0.0
    %1300 = vmatpush1.msra.mxu0 0.0
    %1301 = vmatprep.subr.mxu0 0.0
    %1302 = vmatpush1.msra.mxu0 0.0
    %1303 = vmatprep.subr.mxu0 0.0
    %1304 = vmatpush1.msra.mxu0 0.0
    %1305 = vmatprep.subr.mxu0 0.0
    %1306 = vmatpush1.msra.mxu0 0.0
    %1307 = vmatprep.subr.mxu0 0.0
    %1308 = vmatpush1.msra.mxu0 0.0
    %1309 = vmatprep.subr.mxu0 0.0
    %1310 = vmatpush1.msra.mxu0 0.0
    %1311 = vmatprep.subr.mxu0 0.0
    %1312 = vmatpush1.msra.mxu0 0.0
    %1313 = vmatprep.subr.mxu0 0.0
    %1314 = vmatpush1.msra.mxu0 0.0
    %1315 = vmatprep.subr.mxu0 0.0
    %1316 = vmatpush1.msra.mxu0 0.0
    %1317 = vmatprep.subr.mxu0 0.0
    %1318 = vmatpush1.msra.mxu0 0.0
    %1319 = vmatprep.subr.mxu0 0.0
    %1320 = vmatpush1.msra.mxu0 0.0
    %1321 = vmatprep.subr.mxu0 0.0
    %1322 = vmatpush1.msra.mxu0 0.0
    %1323 = vmatprep.subr.mxu0 0.0
    %1324 = vmatpush1.msra.mxu0 0.0
    %1325 = vmatprep.subr.mxu0 0.0
    %1326 = vmatpush1.msra.mxu0 0.0
    %1327 = vmatprep.subr.mxu0 0.0
    %1328 = vmatpush1.msra.mxu0 %v157
    %1329 = vmatprep.subr.mxu0 0.0
    %1330 = vmatpush2.msra.mxu0 0.0
    %1331 = vmatprep.subr.mxu0 0.0
    %1332 = vmatpush2.msra.mxu0 0.0
    %1333 = vmatprep.subr.mxu0 0.0
    %1334 = vmatpush2.msra.mxu0 0.0
    %1335 = vmatprep.subr.mxu0 0.0
    %1336 = vmatpush2.msra.mxu0 0.0
    %1337 = vmatprep.subr.mxu0 0.0
    %1338 = vmatpush2.msra.mxu0 0.0
    %1339 = vmatprep.subr.mxu0 0.0
    %1340 = vmatpush2.msra.mxu0 0.0
    %1341 = vmatprep.subr.mxu0 0.0
    %1342 = vmatpush2.msra.mxu0 0.0
    %1343 = vmatprep.subr.mxu0 0.0
    %1344 = vmatpush2.msra.mxu0 0.0
    %1345 = vmatprep.subr.mxu0 0.0
    %1346 = vmatpush2.msra.mxu0 0.0
    %1347 = vmatprep.subr.mxu0 0.0
    %1348 = vmatpush2.msra.mxu0 0.0
    %1349 = vmatprep.subr.mxu0 0.0
    %1350 = vmatpush2.msra.mxu0 0.0
    %1351 = vmatprep.subr.mxu0 0.0
    %1352 = vmatpush2.msra.mxu0 0.0
    %1353 = vmatprep.subr.mxu0 0.0
    %1354 = vmatpush2.msra.mxu0 0.0
    %1355 = vmatprep.subr.mxu0 0.0
    %1356 = vmatpush2.msra.mxu0 0.0
    %1357 = vmatprep.subr.mxu0 0.0
    %1358 = vmatpush2.msra.mxu0 0.0
    %1359 = vmatprep.subr.mxu0 0.0
    %1360 = vmatpush2.msra.mxu0 0.0
    %1361 = vmatprep.mubr.f32.mxu0 0.0
    %1362 = vmatmul.mubr.f32.gmra.mxu0 %v1295
    %v1363 = vpop.f32.mrf.mxu0
    %v1364 = vadd.f32 0.0, %v1363
    %v1365 = vpop.f32.mrf.mxu0
    %1366 = vdwg.mxu0
    %v1367 = vadd.f32 %v166, %v1364
    %1368 = vrot.lane.b32.xlu0 %v154, 120
    %v1369 = vpop.permute.xlu0 %1368
    %1370 = vrot.lane.b32.xlu0 %v154, 88
    %v1371 = vpop.permute.xlu0 %1370
    %v1372 = vsel %vm171, %v1369, 0
    %v1374 = vsel %vm171, %v1371, 0
    %1376 = vmatprep.subr.mxu0 0.0
    %1377 = vmatpush1.xpose.msra.mxu0 0.0
    %1378 = vmatprep.subr.mxu0 0.0
    %1379 = vmatpush1.xpose.msra.mxu0 0.0
    %1380 = vmatprep.subr.mxu0 0.0
    %1381 = vmatpush1.xpose.msra.mxu0 0.0
    %1382 = vmatprep.subr.mxu0 0.0
    %1383 = vmatpush1.xpose.msra.mxu0 0.0
    %1384 = vmatprep.subr.mxu0 0.0
    %1385 = vmatpush1.xpose.msra.mxu0 0.0
    %1386 = vmatprep.subr.mxu0 0.0
    %1387 = vmatpush1.xpose.msra.mxu0 0.0
    %1388 = vmatprep.subr.mxu0 0.0
    %1389 = vmatpush1.xpose.msra.mxu0 0.0
    %1390 = vmatprep.subr.mxu0 0.0
    %1391 = vmatpush1.xpose.msra.mxu0 0.0
    %1392 = vmatprep.subr.mxu0 0.0
    %1393 = vmatpush1.xpose.msra.mxu0 0.0
    %1394 = vmatprep.subr.mxu0 0.0
    %1395 = vmatpush1.xpose.msra.mxu0 0.0
    %1396 = vmatprep.subr.mxu0 0.0
    %1397 = vmatpush1.xpose.msra.mxu0 0.0
    %1398 = vmatprep.subr.mxu0 0.0
    %1399 = vmatpush1.xpose.msra.mxu0 0.0
    %1400 = vmatprep.subr.mxu0 0.0
    %1401 = vmatpush1.xpose.msra.mxu0 0.0
    %1402 = vmatprep.subr.mxu0 0.0
    %1403 = vmatpush1.xpose.msra.mxu0 0.0
    %1404 = vmatprep.subr.mxu0 0.0
    %1405 = vmatpush1.xpose.msra.mxu0 0.0
    %1406 = vmatprep.subr.mxu0 0.0
    %1407 = vmatpush1.xpose.msra.mxu0 %v1374
    %1408 = vmatprep.subr.mxu0 0.0
    %1409 = vmatpush2.xpose.msra.mxu0 0.0
    %1410 = vmatprep.subr.mxu0 0.0
    %1411 = vmatpush2.xpose.msra.mxu0 0.0
    %1412 = vmatprep.subr.mxu0 0.0
    %1413 = vmatpush2.xpose.msra.mxu0 0.0
    %1414 = vmatprep.subr.mxu0 0.0
    %1415 = vmatpush2.xpose.msra.mxu0 0.0
    %1416 = vmatprep.subr.mxu0 0.0
    %1417 = vmatpush2.xpose.msra.mxu0 0.0
    %1418 = vmatprep.subr.mxu0 0.0
    %1419 = vmatpush2.xpose.msra.mxu0 0.0
    %1420 = vmatprep.subr.mxu0 0.0
    %1421 = vmatpush2.xpose.msra.mxu0 0.0
    %1422 = vmatprep.subr.mxu0 0.0
    %1423 = vmatpush2.xpose.msra.mxu0 0.0
    %1424 = vmatprep.subr.mxu0 0.0
    %1425 = vmatpush2.xpose.msra.mxu0 0.0
    %1426 = vmatprep.subr.mxu0 0.0
    %1427 = vmatpush2.xpose.msra.mxu0 0.0
    %1428 = vmatprep.subr.mxu0 0.0
    %1429 = vmatpush2.xpose.msra.mxu0 0.0
    %1430 = vmatprep.subr.mxu0 0.0
    %1431 = vmatpush2.xpose.msra.mxu0 0.0
    %1432 = vmatprep.subr.mxu0 0.0
    %1433 = vmatpush2.xpose.msra.mxu0 0.0
    %1434 = vmatprep.subr.mxu0 0.0
    %1435 = vmatpush2.xpose.msra.mxu0 0.0
    %1436 = vmatprep.subr.mxu0 0.0
    %1437 = vmatpush2.xpose.msra.mxu0 0.0
    %1438 = vmatprep.subr.mxu0 0.0
    %1439 = vmatpush2.xpose.msra.mxu0 0.0
    %1440 = vmatprep.mubr.f32.mxu0 0.0
    %1441 = vmatmul.mubr.f32.gmra.mxu0 %v1372
    %v1442 = vpop.f32.mrf.mxu0
    %v1443 = vadd.f32 0.0, %v1442
    %v1444 = vpop.f32.mrf.mxu0
    %1445 = vdwg.mxu0
    %v1446 = vmul.f32 %v1443, 0.17677669
    %v1447 = vsel %vm171, %v1446, -inf
    %1448 = vmax.xlane.f32.xlu0 %v1447
    %v1449 = vpop.xlane.xlu0 %1448
    %v1450 = vsub.f32 %v1446, %v1449
    %v1451 = vmul.f32 %v1450, 1.442695
    %v1452 = vpow.pop %v1451
    %v1453 = vsel %vm171, %v1452, 0.0
    %1454 = vadd.xlane.f32.xlu0 %v1453
    %v1455 = vpop.xlane.xlu0 %1454
    %v1456 = vrcp.pop %v1455
    %v1457 = vmul.f32 %v1452, %v1456
    %1458 = vrot.lane.b32.xlu0 %v154, 56
    %v1459 = vpop.permute.xlu0 %1458
    %v1462 = vsel %vm171, %v1457, 0
    %1464 = vmatprep.subr.mxu0 0.0
    %1465 = vmatpush1.msra.mxu0 0.0
    %1466 = vmatprep.subr.mxu0 0.0
    %1467 = vmatpush1.msra.mxu0 0.0
    %1468 = vmatprep.subr.mxu0 0.0
    %1469 = vmatpush1.msra.mxu0 0.0
    %1470 = vmatprep.subr.mxu0 0.0
    %1471 = vmatpush1.msra.mxu0 0.0
    %1472 = vmatprep.subr.mxu0 0.0
    %1473 = vmatpush1.msra.mxu0 0.0
    %1474 = vmatprep.subr.mxu0 0.0
    %1475 = vmatpush1.msra.mxu0 0.0
    %1476 = vmatprep.subr.mxu0 0.0
    %1477 = vmatpush1.msra.mxu0 0.0
    %1478 = vmatprep.subr.mxu0 0.0
    %1479 = vmatpush1.msra.mxu0 0.0
    %1480 = vmatprep.subr.mxu0 0.0
    %1481 = vmatpush1.msra.mxu0 0.0
    %1482 = vmatprep.subr.mxu0 0.0
    %1483 = vmatpush1.msra.mxu0 0.0
    %1484 = vmatprep.subr.mxu0 0.0
    %1485 = vmatpush1.msra.mxu0 0.0
    %1486 = vmatprep.subr.mxu0 0.0
    %1487 = vmatpush1.msra.mxu0 0.0
    %1488 = vmatprep.subr.mxu0 0.0
    %1489 = vmatpush1.msra.mxu0 0.0
    %1490 = vmatprep.subr.mxu0 0.0
    %1491 = vmatpush1.msra.mxu0 0.0
    %1492 = vmatprep.subr.mxu0 0.0
    %1493 = vmatpush1.msra.mxu0 0.0
    %1494 = vmatprep.subr.mxu0 0.0
    %1495 = vmatpush1.msra.mxu0 %v1459
    %1496 = vmatprep.subr.mxu0 0.0
    %1497 = vmatpush2.msra.mxu0 0.0
    %1498 = vmatprep.subr.mxu0 0.0
    %1499 = vmatpush2.msra.mxu0 0.0
    %1500 = vmatprep.subr.mxu0 0.0
    %1501 = vmatpush2.msra.mxu0 0.0
    %1502 = vmatprep.subr.mxu0 0.0
    %1503 = vmatpush2.msra.mxu0 0.0
    %1504 = vmatprep.subr.mxu0 0.0
    %1505 = vmatpush2.msra.mxu0 0.0
    %1506 = vmatprep.subr.mxu0 0.0
    %1507 = vmatpush2.msra.mxu0 0.0
    %1508 = vmatprep.subr.mxu0 0.0
    %1509 = vmatpush2.msra.mxu0 0.0
    %1510 = vmatprep.subr.mxu0 0.0
    %1511 = vmatpush2.msra.mxu0 0.0
    %1512 = vmatprep.subr.mxu0 0.0
    %1513 = vmatpush2.msra.mxu0 0.0
    %1514 = vmatprep.subr.mxu0 0.0
    %1515 = vmatpush2.msra.mxu0 0.0
    %1516 = vmatprep.subr.mxu0 0.0
    %1517 = vmatpush2.msra.mxu0 0.0
    %1518 = vmatprep.subr.mxu0 0.0
    %1519 = vmatpush2.msra.mxu0 0.0
    %1520 = vmatprep.subr.mxu0 0.0
    %1521 = vmatpush2.msra.mxu0 0.0
    %1522 = vmatprep.subr.mxu0 0.0
    %1523 = vmatpush2.msra.mxu0 0.0
    %1524 = vmatprep.subr.mxu0 0.0
    %1525 = vmatpush2.msra.mxu0 0.0
    %1526 = vmatprep.subr.mxu0 0.0
    %1527 = vmatpush2.msra.mxu0 0.0
    %1528 = vmatprep.mubr.f32.mxu0 0.0
    %1529 = vmatmul.mubr.f32.gmra.mxu0 %v1462
    %v1530 = vpop.f32.mrf.mxu0
    %v1531 = vadd.f32 0.0, %v1530
    %v1532 = vpop.f32.mrf.mxu0
    %1533 = vdwg.mxu0
    %v1535 = vsel %vm171, %v1531, 0
    %1537 = vmatprep.subr.mxu0 0.0
    %1538 = vmatpush1.msra.mxu0 0.0
    %1539 = vmatprep.subr.mxu0 0.0
    %1540 = vmatpush1.msra.mxu0 0.0
    %1541 = vmatprep.subr.mxu0 0.0
    %1542 = vmatpush1.msra.mxu0 0.0
    %1543 = vmatprep.subr.mxu0 0.0
    %1544 = vmatpush1.msra.mxu0 0.0
    %1545 = vmatprep.subr.mxu0 0.0
    %1546 = vmatpush1.msra.mxu0 0.0
    %1547 = vmatprep.subr.mxu0 0.0
    %1548 = vmatpush1.msra.mxu0 0.0
    %1549 = vmatprep.subr.mxu0 0.0
    %1550 = vmatpush1.msra.mxu0 0.0
    %1551 = vmatprep.subr.mxu0 0.0
    %1552 = vmatpush1.msra.mxu0 0.0
    %1553 = vmatprep.subr.mxu0 0.0
    %1554 = vmatpush1.msra.mxu0 0.0
    %1555 = vmatprep.subr.mxu0 0.0
    %1556 = vmatpush1.msra.mxu0 0.0
    %1557 = vmatprep.subr.mxu0 0.0
    %1558 = vmatpush1.msra.mxu0 0.0
    %1559 = vmatprep.subr.mxu0 0.0
    %1560 = vmatpush1.msra.mxu0 0.0
    %1561 = vmatprep.subr.mxu0 0.0
    %1562 = vmatpush1.msra.mxu0 0.0
    %1563 = vmatprep.subr.mxu0 0.0
    %1564 = vmatpush1.msra.mxu0 0.0
    %1565 = vmatprep.subr.mxu0 0.0
    %1566 = vmatpush1.msra.mxu0 0.0
    %1567 = vmatprep.subr.mxu0 0.0
    %1568 = vmatpush1.msra.mxu0 %v158
    %1569 = vmatprep.subr.mxu0 0.0
    %1570 = vmatpush2.msra.mxu0 0.0
    %1571 = vmatprep.subr.mxu0 0.0
    %1572 = vmatpush2.msra.mxu0 0.0
    %1573 = vmatprep.subr.mxu0 0.0
    %1574 = vmatpush2.msra.mxu0 0.0
    %1575 = vmatprep.subr.mxu0 0.0
    %1576 = vmatpush2.msra.mxu0 0.0
    %1577 = vmatprep.subr.mxu0 0.0
    %1578 = vmatpush2.msra.mxu0 0.0
    %1579 = vmatprep.subr.mxu0 0.0
    %1580 = vmatpush2.msra.mxu0 0.0
    %1581 = vmatprep.subr.mxu0 0.0
    %1582 = vmatpush2.msra.mxu0 0.0
    %1583 = vmatprep.subr.mxu0 0.0
    %1584 = vmatpush2.msra.mxu0 0.0
    %1585 = vmatprep.subr.mxu0 0.0
    %1586 = vmatpush2.msra.mxu0 0.0
    %1587 = vmatprep.subr.mxu0 0.0
    %1588 = vmatpush2.msra.mxu0 0.0
    %1589 = vmatprep.subr.mxu0 0.0
    %1590 = vmatpush2.msra.mxu0 0.0
    %1591 = vmatprep.subr.mxu0 0.0
    %1592 = vmatpush2.msra.mxu0 0.0
    %1593 = vmatprep.subr.mxu0 0.0
    %1594 = vmatpush2.msra.mxu0 0.0
    %1595 = vmatprep.subr.mxu0 0.0
    %1596 = vmatpush2.msra.mxu0 0.0
    %1597 = vmatprep.subr.mxu0 0.0
    %1598 = vmatpush2.msra.mxu0 0.0
    %1599 = vmatprep.subr.mxu0 0.0
    %1600 = vmatpush2.msra.mxu0 0.0
    %1601 = vmatprep.mubr.f32.mxu0 0.0
    %1602 = vmatmul.mubr.f32.gmra.mxu0 %v1535
    %v1603 = vpop.f32.mrf.mxu0
    %v1604 = vadd.f32 0.0, %v1603
    %v1605 = vpop.f32.mrf.mxu0
    %1606 = vdwg.mxu0
    %v1607 = vadd.f32 %v1367, %v1604
    %1608 = vrot.lane.b32.xlu0 %v154, 112
    %v1609 = vpop.permute.xlu0 %1608
    %1610 = vrot.lane.b32.xlu0 %v154, 80
    %v1611 = vpop.permute.xlu0 %1610
    %v1612 = vsel %vm171, %v1609, 0
    %v1614 = vsel %vm171, %v1611, 0
    %1616 = vmatprep.subr.mxu0 0.0
    %1617 = vmatpush1.xpose.msra.mxu0 0.0
    %1618 = vmatprep.subr.mxu0 0.0
    %1619 = vmatpush1.xpose.msra.mxu0 0.0
    %1620 = vmatprep.subr.mxu0 0.0
    %1621 = vmatpush1.xpose.msra.mxu0 0.0
    %1622 = vmatprep.subr.mxu0 0.0
    %1623 = vmatpush1.xpose.msra.mxu0 0.0
    %1624 = vmatprep.subr.mxu0 0.0
    %1625 = vmatpush1.xpose.msra.mxu0 0.0
    %1626 = vmatprep.subr.mxu0 0.0
    %1627 = vmatpush1.xpose.msra.mxu0 0.0
    %1628 = vmatprep.subr.mxu0 0.0
    %1629 = vmatpush1.xpose.msra.mxu0 0.0
    %1630 = vmatprep.subr.mxu0 0.0
    %1631 = vmatpush1.xpose.msra.mxu0 0.0
    %1632 = vmatprep.subr.mxu0 0.0
    %1633 = vmatpush1.xpose.msra.mxu0 0.0
    %1634 = vmatprep.subr.mxu0 0.0
    %1635 = vmatpush1.xpose.msra.mxu0 0.0
    %1636 = vmatprep.subr.mxu0 0.0
    %1637 = vmatpush1.xpose.msra.mxu0 0.0
    %1638 = vmatprep.subr.mxu0 0.0
    %1639 = vmatpush1.xpose.msra.mxu0 0.0
    %1640 = vmatprep.subr.mxu0 0.0
    %1641 = vmatpush1.xpose.msra.mxu0 0.0
    %1642 = vmatprep.subr.mxu0 0.0
    %1643 = vmatpush1.xpose.msra.mxu0 0.0
    %1644 = vmatprep.subr.mxu0 0.0
    %1645 = vmatpush1.xpose.msra.mxu0 0.0
    %1646 = vmatprep.subr.mxu0 0.0
    %1647 = vmatpush1.xpose.msra.mxu0 %v1614
    %1648 = vmatprep.subr.mxu0 0.0
    %1649 = vmatpush2.xpose.msra.mxu0 0.0
    %1650 = vmatprep.subr.mxu0 0.0
    %1651 = vmatpush2.xpose.msra.mxu0 0.0
    %1652 = vmatprep.subr.mxu0 0.0
    %1653 = vmatpush2.xpose.msra.mxu0 0.0
    %1654 = vmatprep.subr.mxu0 0.0
    %1655 = vmatpush2.xpose.msra.mxu0 0.0
    %1656 = vmatprep.subr.mxu0 0.0
    %1657 = vmatpush2.xpose.msra.mxu0 0.0
    %1658 = vmatprep.subr.mxu0 0.0
    %1659 = vmatpush2.xpose.msra.mxu0 0.0
    %1660 = vmatprep.subr.mxu0 0.0
    %1661 = vmatpush2.xpose.msra.mxu0 0.0
    %1662 = vmatprep.subr.mxu0 0.0
    %1663 = vmatpush2.xpose.msra.mxu0 0.0
    %1664 = vmatprep.subr.mxu0 0.0
    %1665 = vmatpush2.xpose.msra.mxu0 0.0
    %1666 = vmatprep.subr.mxu0 0.0
    %1667 = vmatpush2.xpose.msra.mxu0 0.0
    %1668 = vmatprep.subr.mxu0 0.0
    %1669 = vmatpush2.xpose.msra.mxu0 0.0
    %1670 = vmatprep.subr.mxu0 0.0
    %1671 = vmatpush2.xpose.msra.mxu0 0.0
    %1672 = vmatprep.subr.mxu0 0.0
    %1673 = vmatpush2.xpose.msra.mxu0 0.0
    %1674 = vmatprep.subr.mxu0 0.0
    %1675 = vmatpush2.xpose.msra.mxu0 0.0
    %1676 = vmatprep.subr.mxu0 0.0
    %1677 = vmatpush2.xpose.msra.mxu0 0.0
    %1678 = vmatprep.subr.mxu0 0.0
    %1679 = vmatpush2.xpose.msra.mxu0 0.0
    %1680 = vmatprep.mubr.f32.mxu0 0.0
    %1681 = vmatmul.mubr.f32.gmra.mxu0 %v1612
    %v1682 = vpop.f32.mrf.mxu0
    %v1683 = vadd.f32 0.0, %v1682
    %v1684 = vpop.f32.mrf.mxu0
    %1685 = vdwg.mxu0
    %v1686 = vmul.f32 %v1683, 0.17677669
    %v1687 = vsel %vm171, %v1686, -inf
    %1688 = vmax.xlane.f32.xlu0 %v1687
    %v1689 = vpop.xlane.xlu0 %1688
    %v1690 = vsub.f32 %v1686, %v1689
    %v1691 = vmul.f32 %v1690, 1.442695
    %v1692 = vpow.pop %v1691
    %v1693 = vsel %vm171, %v1692, 0.0
    %1694 = vadd.xlane.f32.xlu0 %v1693
    %v1695 = vpop.xlane.xlu0 %1694
    %v1696 = vrcp.pop %v1695
    %v1697 = vmul.f32 %v1692, %v1696
    %1698 = vrot.lane.b32.xlu0 %v154, 48
    %v1699 = vpop.permute.xlu0 %1698
    %v1702 = vsel %vm171, %v1697, 0
    %1704 = vmatprep.subr.mxu0 0.0
    %1705 = vmatpush1.msra.mxu0 0.0
    %1706 = vmatprep.subr.mxu0 0.0
    %1707 = vmatpush1.msra.mxu0 0.0
    %1708 = vmatprep.subr.mxu0 0.0
    %1709 = vmatpush1.msra.mxu0 0.0
    %1710 = vmatprep.subr.mxu0 0.0
    %1711 = vmatpush1.msra.mxu0 0.0
    %1712 = vmatprep.subr.mxu0 0.0
    %1713 = vmatpush1.msra.mxu0 0.0
    %1714 = vmatprep.subr.mxu0 0.0
    %1715 = vmatpush1.msra.mxu0 0.0
    %1716 = vmatprep.subr.mxu0 0.0
    %1717 = vmatpush1.msra.mxu0 0.0
    %1718 = vmatprep.subr.mxu0 0.0
    %1719 = vmatpush1.msra.mxu0 0.0
    %1720 = vmatprep.subr.mxu0 0.0
    %1721 = vmatpush1.msra.mxu0 0.0
    %1722 = vmatprep.subr.mxu0 0.0
    %1723 = vmatpush1.msra.mxu0 0.0
    %1724 = vmatprep.subr.mxu0 0.0
    %1725 = vmatpush1.msra.mxu0 0.0
    %1726 = vmatprep.subr.mxu0 0.0
    %1727 = vmatpush1.msra.mxu0 0.0
    %1728 = vmatprep.subr.mxu0 0.0
    %1729 = vmatpush1.msra.mxu0 0.0
    %1730 = vmatprep.subr.mxu0 0.0
    %1731 = vmatpush1.msra.mxu0 0.0
    %1732 = vmatprep.subr.mxu0 0.0
    %1733 = vmatpush1.msra.mxu0 0.0
    %1734 = vmatprep.subr.mxu0 0.0
    %1735 = vmatpush1.msra.mxu0 %v1699
    %1736 = vmatprep.subr.mxu0 0.0
    %1737 = vmatpush2.msra.mxu0 0.0
    %1738 = vmatprep.subr.mxu0 0.0
    %1739 = vmatpush2.msra.mxu0 0.0
    %1740 = vmatprep.subr.mxu0 0.0
    %1741 = vmatpush2.msra.mxu0 0.0
    %1742 = vmatprep.subr.mxu0 0.0
    %1743 = vmatpush2.msra.mxu0 0.0
    %1744 = vmatprep.subr.mxu0 0.0
    %1745 = vmatpush2.msra.mxu0 0.0
    %1746 = vmatprep.subr.mxu0 0.0
    %1747 = vmatpush2.msra.mxu0 0.0
    %1748 = vmatprep.subr.mxu0 0.0
    %1749 = vmatpush2.msra.mxu0 0.0
    %1750 = vmatprep.subr.mxu0 0.0
    %1751 = vmatpush2.msra.mxu0 0.0
    %1752 = vmatprep.subr.mxu0 0.0
    %1753 = vmatpush2.msra.mxu0 0.0
    %1754 = vmatprep.subr.mxu0 0.0
    %1755 = vmatpush2.msra.mxu0 0.0
    %1756 = vmatprep.subr.mxu0 0.0
    %1757 = vmatpush2.msra.mxu0 0.0
    %1758 = vmatprep.subr.mxu0 0.0
    %1759 = vmatpush2.msra.mxu0 0.0
    %1760 = vmatprep.subr.mxu0 0.0
    %1761 = vmatpush2.msra.mxu0 0.0
    %1762 = vmatprep.subr.mxu0 0.0
    %1763 = vmatpush2.msra.mxu0 0.0
    %1764 = vmatprep.subr.mxu0 0.0
    %1765 = vmatpush2.msra.mxu0 0.0
    %1766 = vmatprep.subr.mxu0 0.0
    %1767 = vmatpush2.msra.mxu0 0.0
    %1768 = vmatprep.mubr.f32.mxu0 0.0
    %1769 = vmatmul.mubr.f32.gmra.mxu0 %v1702
    %v1770 = vpop.f32.mrf.mxu0
    %v1771 = vadd.f32 0.0, %v1770
    %v1772 = vpop.f32.mrf.mxu0
    %1773 = vdwg.mxu0
    %v1775 = vsel %vm171, %v1771, 0
    %1777 = vmatprep.subr.mxu0 0.0
    %1778 = vmatpush1.msra.mxu0 0.0
    %1779 = vmatprep.subr.mxu0 0.0
    %1780 = vmatpush1.msra.mxu0 0.0
    %1781 = vmatprep.subr.mxu0 0.0
    %1782 = vmatpush1.msra.mxu0 0.0
    %1783 = vmatprep.subr.mxu0 0.0
    %1784 = vmatpush1.msra.mxu0 0.0
    %1785 = vmatprep.subr.mxu0 0.0
    %1786 = vmatpush1.msra.mxu0 0.0
    %1787 = vmatprep.subr.mxu0 0.0
    %1788 = vmatpush1.msra.mxu0 0.0
    %1789 = vmatprep.subr.mxu0 0.0
    %1790 = vmatpush1.msra.mxu0 0.0
    %1791 = vmatprep.subr.mxu0 0.0
    %1792 = vmatpush1.msra.mxu0 0.0
    %1793 = vmatprep.subr.mxu0 0.0
    %1794 = vmatpush1.msra.mxu0 0.0
    %1795 = vmatprep.subr.mxu0 0.0
    %1796 = vmatpush1.msra.mxu0 0.0
    %1797 = vmatprep.subr.mxu0 0.0
    %1798 = vmatpush1.msra.mxu0 0.0
    %1799 = vmatprep.subr.mxu0 0.0
    %1800 = vmatpush1.msra.mxu0 0.0
    %1801 = vmatprep.subr.mxu0 0.0
    %1802 = vmatpush1.msra.mxu0 0.0
    %1803 = vmatprep.subr.mxu0 0.0
    %1804 = vmatpush1.msra.mxu0 0.0
    %1805 = vmatprep.subr.mxu0 0.0
    %1806 = vmatpush1.msra.mxu0 0.0
    %1807 = vmatprep.subr.mxu0 0.0
    %1808 = vmatpush1.msra.mxu0 %v159
    %1809 = vmatprep.subr.mxu0 0.0
    %1810 = vmatpush2.msra.mxu0 0.0
    %1811 = vmatprep.subr.mxu0 0.0
    %1812 = vmatpush2.msra.mxu0 0.0
    %1813 = vmatprep.subr.mxu0 0.0
    %1814 = vmatpush2.msra.mxu0 0.0
    %1815 = vmatprep.subr.mxu0 0.0
    %1816 = vmatpush2.msra.mxu0 0.0
    %1817 = vmatprep.subr.mxu0 0.0
    %1818 = vmatpush2.msra.mxu0 0.0
    %1819 = vmatprep.subr.mxu0 0.0
    %1820 = vmatpush2.msra.mxu0 0.0
    %1821 = vmatprep.subr.mxu0 0.0
    %1822 = vmatpush2.msra.mxu0 0.0
    %1823 = vmatprep.subr.mxu0 0.0
    %1824 = vmatpush2.msra.mxu0 0.0
    %1825 = vmatprep.subr.mxu0 0.0
    %1826 = vmatpush2.msra.mxu0 0.0
    %1827 = vmatprep.subr.mxu0 0.0
    %1828 = vmatpush2.msra.mxu0 0.0
    %1829 = vmatprep.subr.mxu0 0.0
    %1830 = vmatpush2.msra.mxu0 0.0
    %1831 = vmatprep.subr.mxu0 0.0
    %1832 = vmatpush2.msra.mxu0 0.0
    %1833 = vmatprep.subr.mxu0 0.0
    %1834 = vmatpush2.msra.mxu0 0.0
    %1835 = vmatprep.subr.mxu0 0.0
    %1836 = vmatpush2.msra.mxu0 0.0
    %1837 = vmatprep.subr.mxu0 0.0
    %1838 = vmatpush2.msra.mxu0 0.0
    %1839 = vmatprep.subr.mxu0 0.0
    %1840 = vmatpush2.msra.mxu0 0.0
    %1841 = vmatprep.mubr.f32.mxu0 0.0
    %1842 = vmatmul.mubr.f32.gmra.mxu0 %v1775
    %v1843 = vpop.f32.mrf.mxu0
    %v1844 = vadd.f32 0.0, %v1843
    %v1845 = vpop.f32.mrf.mxu0
    %1846 = vdwg.mxu0
    %v1847 = vadd.f32 %v1607, %v1844
    %1848 = vrot.lane.b32.xlu0 %v154, 104
    %v1849 = vpop.permute.xlu0 %1848
    %1850 = vrot.lane.b32.xlu0 %v154, 72
    %v1851 = vpop.permute.xlu0 %1850
    %v1852 = vsel %vm171, %v1849, 0
    %v1854 = vsel %vm171, %v1851, 0
    %1856 = vmatprep.subr.mxu0 0.0
    %1857 = vmatpush1.xpose.msra.mxu0 0.0
    %1858 = vmatprep.subr.mxu0 0.0
    %1859 = vmatpush1.xpose.msra.mxu0 0.0
    %1860 = vmatprep.subr.mxu0 0.0
    %1861 = vmatpush1.xpose.msra.mxu0 0.0
    %1862 = vmatprep.subr.mxu0 0.0
    %1863 = vmatpush1.xpose.msra.mxu0 0.0
    %1864 = vmatprep.subr.mxu0 0.0
    %1865 = vmatpush1.xpose.msra.mxu0 0.0
    %1866 = vmatprep.subr.mxu0 0.0
    %1867 = vmatpush1.xpose.msra.mxu0 0.0
    %1868 = vmatprep.subr.mxu0 0.0
    %1869 = vmatpush1.xpose.msra.mxu0 0.0
    %1870 = vmatprep.subr.mxu0 0.0
    %1871 = vmatpush1.xpose.msra.mxu0 0.0
    %1872 = vmatprep.subr.mxu0 0.0
    %1873 = vmatpush1.xpose.msra.mxu0 0.0
    %1874 = vmatprep.subr.mxu0 0.0
    %1875 = vmatpush1.xpose.msra.mxu0 0.0
    %1876 = vmatprep.subr.mxu0 0.0
    %1877 = vmatpush1.xpose.msra.mxu0 0.0
    %1878 = vmatprep.subr.mxu0 0.0
    %1879 = vmatpush1.xpose.msra.mxu0 0.0
    %1880 = vmatprep.subr.mxu0 0.0
    %1881 = vmatpush1.xpose.msra.mxu0 0.0
    %1882 = vmatprep.subr.mxu0 0.0
    %1883 = vmatpush1.xpose.msra.mxu0 0.0
    %1884 = vmatprep.subr.mxu0 0.0
    %1885 = vmatpush1.xpose.msra.mxu0 0.0
    %1886 = vmatprep.subr.mxu0 0.0
    %1887 = vmatpush1.xpose.msra.mxu0 %v1854
    %1888 = vmatprep.subr.mxu0 0.0
    %1889 = vmatpush2.xpose.msra.mxu0 0.0
    %1890 = vmatprep.subr.mxu0 0.0
    %1891 = vmatpush2.xpose.msra.mxu0 0.0
    %1892 = vmatprep.subr.mxu0 0.0
    %1893 = vmatpush2.xpose.msra.mxu0 0.0
    %1894 = vmatprep.subr.mxu0 0.0
    %1895 = vmatpush2.xpose.msra.mxu0 0.0
    %1896 = vmatprep.subr.mxu0 0.0
    %1897 = vmatpush2.xpose.msra.mxu0 0.0
    %1898 = vmatprep.subr.mxu0 0.0
    %1899 = vmatpush2.xpose.msra.mxu0 0.0
    %1900 = vmatprep.subr.mxu0 0.0
    %1901 = vmatpush2.xpose.msra.mxu0 0.0
    %1902 = vmatprep.subr.mxu0 0.0
    %1903 = vmatpush2.xpose.msra.mxu0 0.0
    %1904 = vmatprep.subr.mxu0 0.0
    %1905 = vmatpush2.xpose.msra.mxu0 0.0
    %1906 = vmatprep.subr.mxu0 0.0
    %1907 = vmatpush2.xpose.msra.mxu0 0.0
    %1908 = vmatprep.subr.mxu0 0.0
    %1909 = vmatpush2.xpose.msra.mxu0 0.0
    %1910 = vmatprep.subr.mxu0 0.0
    %1911 = vmatpush2.xpose.msra.mxu0 0.0
    %1912 = vmatprep.subr.mxu0 0.0
    %1913 = vmatpush2.xpose.msra.mxu0 0.0
    %1914 = vmatprep.subr.mxu0 0.0
    %1915 = vmatpush2.xpose.msra.mxu0 0.0
    %1916 = vmatprep.subr.mxu0 0.0
    %1917 = vmatpush2.xpose.msra.mxu0 0.0
    %1918 = vmatprep.subr.mxu0 0.0
    %1919 = vmatpush2.xpose.msra.mxu0 0.0
    %1920 = vmatprep.mubr.f32.mxu0 0.0
    %1921 = vmatmul.mubr.f32.gmra.mxu0 %v1852
    %v1922 = vpop.f32.mrf.mxu0
    %v1923 = vadd.f32 0.0, %v1922
    %v1924 = vpop.f32.mrf.mxu0
    %1925 = vdwg.mxu0
    %v1926 = vmul.f32 %v1923, 0.17677669
    %v1927 = vsel %vm171, %v1926, -inf
    %1928 = vmax.xlane.f32.xlu0 %v1927
    %v1929 = vpop.xlane.xlu0 %1928
    %v1930 = vsub.f32 %v1926, %v1929
    %v1931 = vmul.f32 %v1930, 1.442695
    %v1932 = vpow.pop %v1931
    %v1933 = vsel %vm171, %v1932, 0.0
    %1934 = vadd.xlane.f32.xlu0 %v1933
    %v1935 = vpop.xlane.xlu0 %1934
    %v1936 = vrcp.pop %v1935
    %v1937 = vmul.f32 %v1932, %v1936
    %1938 = vrot.lane.b32.xlu0 %v154, 40
    %v1939 = vpop.permute.xlu0 %1938
    %v1942 = vsel %vm171, %v1937, 0
    %1944 = vmatprep.subr.mxu0 0.0
    %1945 = vmatpush1.msra.mxu0 0.0
    %1946 = vmatprep.subr.mxu0 0.0
    %1947 = vmatpush1.msra.mxu0 0.0
    %1948 = vmatprep.subr.mxu0 0.0
    %1949 = vmatpush1.msra.mxu0 0.0
    %1950 = vmatprep.subr.mxu0 0.0
    %1951 = vmatpush1.msra.mxu0 0.0
    %1952 = vmatprep.subr.mxu0 0.0
    %1953 = vmatpush1.msra.mxu0 0.0
    %1954 = vmatprep.subr.mxu0 0.0
    %1955 = vmatpush1.msra.mxu0 0.0
    %1956 = vmatprep.subr.mxu0 0.0
    %1957 = vmatpush1.msra.mxu0 0.0
    %1958 = vmatprep.subr.mxu0 0.0
    %1959 = vmatpush1.msra.mxu0 0.0
    %1960 = vmatprep.subr.mxu0 0.0
    %1961 = vmatpush1.msra.mxu0 0.0
    %1962 = vmatprep.subr.mxu0 0.0
    %1963 = vmatpush1.msra.mxu0 0.0
    %1964 = vmatprep.subr.mxu0 0.0
    %1965 = vmatpush1.msra.mxu0 0.0
    %1966 = vmatprep.subr.mxu0 0.0
    %1967 = vmatpush1.msra.mxu0 0.0
    %1968 = vmatprep.subr.mxu0 0.0
    %1969 = vmatpush1.msra.mxu0 0.0
    %1970 = vmatprep.subr.mxu0 0.0
    %1971 = vmatpush1.msra.mxu0 0.0
    %1972 = vmatprep.subr.mxu0 0.0
    %1973 = vmatpush1.msra.mxu0 0.0
    %1974 = vmatprep.subr.mxu0 0.0
    %1975 = vmatpush1.msra.mxu0 %v1939
    %1976 = vmatprep.subr.mxu0 0.0
    %1977 = vmatpush2.msra.mxu0 0.0
    %1978 = vmatprep.subr.mxu0 0.0
    %1979 = vmatpush2.msra.mxu0 0.0
    %1980 = vmatprep.subr.mxu0 0.0
    %1981 = vmatpush2.msra.mxu0 0.0
    %1982 = vmatprep.subr.mxu0 0.0
    %1983 = vmatpush2.msra.mxu0 0.0
    %1984 = vmatprep.subr.mxu0 0.0
    %1985 = vmatpush2.msra.mxu0 0.0
    %1986 = vmatprep.subr.mxu0 0.0
    %1987 = vmatpush2.msra.mxu0 0.0
    %1988 = vmatprep.subr.mxu0 0.0
    %1989 = vmatpush2.msra.mxu0 0.0
    %1990 = vmatprep.subr.mxu0 0.0
    %1991 = vmatpush2.msra.mxu0 0.0
    %1992 = vmatprep.subr.mxu0 0.0
    %1993 = vmatpush2.msra.mxu0 0.0
    %1994 = vmatprep.subr.mxu0 0.0
    %1995 = vmatpush2.msra.mxu0 0.0
    %1996 = vmatprep.subr.mxu0 0.0
    %1997 = vmatpush2.msra.mxu0 0.0
    %1998 = vmatprep.subr.mxu0 0.0
    %1999 = vmatpush2.msra.mxu0 0.0
    %2000 = vmatprep.subr.mxu0 0.0
    %2001 = vmatpush2.msra.mxu0 0.0
    %2002 = vmatprep.subr.mxu0 0.0
    %2003 = vmatpush2.msra.mxu0 0.0
    %2004 = vmatprep.subr.mxu0 0.0
    %2005 = vmatpush2.msra.mxu0 0.0
    %2006 = vmatprep.subr.mxu0 0.0
    %2007 = vmatpush2.msra.mxu0 0.0
    %2008 = vmatprep.mubr.f32.mxu0 0.0
    %2009 = vmatmul.mubr.f32.gmra.mxu0 %v1942
    %v2010 = vpop.f32.mrf.mxu0
    %v2011 = vadd.f32 0.0, %v2010
    %v2012 = vpop.f32.mrf.mxu0
    %2013 = vdwg.mxu0
    %v2015 = vsel %vm171, %v2011, 0
    %2017 = vmatprep.subr.mxu0 0.0
    %2018 = vmatpush1.msra.mxu0 0.0
    %2019 = vmatprep.subr.mxu0 0.0
    %2020 = vmatpush1.msra.mxu0 0.0
    %2021 = vmatprep.subr.mxu0 0.0
    %2022 = vmatpush1.msra.mxu0 0.0
    %2023 = vmatprep.subr.mxu0 0.0
    %2024 = vmatpush1.msra.mxu0 0.0
    %2025 = vmatprep.subr.mxu0 0.0
    %2026 = vmatpush1.msra.mxu0 0.0
    %2027 = vmatprep.subr.mxu0 0.0
    %2028 = vmatpush1.msra.mxu0 0.0
    %2029 = vmatprep.subr.mxu0 0.0
    %2030 = vmatpush1.msra.mxu0 0.0
    %2031 = vmatprep.subr.mxu0 0.0
    %2032 = vmatpush1.msra.mxu0 0.0
    %2033 = vmatprep.subr.mxu0 0.0
    %2034 = vmatpush1.msra.mxu0 0.0
    %2035 = vmatprep.subr.mxu0 0.0
    %2036 = vmatpush1.msra.mxu0 0.0
    %2037 = vmatprep.subr.mxu0 0.0
    %2038 = vmatpush1.msra.mxu0 0.0
    %2039 = vmatprep.subr.mxu0 0.0
    %2040 = vmatpush1.msra.mxu0 0.0
    %2041 = vmatprep.subr.mxu0 0.0
    %2042 = vmatpush1.msra.mxu0 0.0
    %2043 = vmatprep.subr.mxu0 0.0
    %2044 = vmatpush1.msra.mxu0 0.0
    %2045 = vmatprep.subr.mxu0 0.0
    %2046 = vmatpush1.msra.mxu0 0.0
    %2047 = vmatprep.subr.mxu0 0.0
    %2048 = vmatpush1.msra.mxu0 %v160
    %2049 = vmatprep.subr.mxu0 0.0
    %2050 = vmatpush2.msra.mxu0 0.0
    %2051 = vmatprep.subr.mxu0 0.0
    %2052 = vmatpush2.msra.mxu0 0.0
    %2053 = vmatprep.subr.mxu0 0.0
    %2054 = vmatpush2.msra.mxu0 0.0
    %2055 = vmatprep.subr.mxu0 0.0
    %2056 = vmatpush2.msra.mxu0 0.0
    %2057 = vmatprep.subr.mxu0 0.0
    %2058 = vmatpush2.msra.mxu0 0.0
    %2059 = vmatprep.subr.mxu0 0.0
    %2060 = vmatpush2.msra.mxu0 0.0
    %2061 = vmatprep.subr.mxu0 0.0
    %2062 = vmatpush2.msra.mxu0 0.0
    %2063 = vmatprep.subr.mxu0 0.0
    %2064 = vmatpush2.msra.mxu0 0.0
    %2065 = vmatprep.subr.mxu0 0.0
    %2066 = vmatpush2.msra.mxu0 0.0
    %2067 = vmatprep.subr.mxu0 0.0
    %2068 = vmatpush2.msra.mxu0 0.0
    %2069 = vmatprep.subr.mxu0 0.0
    %2070 = vmatpush2.msra.mxu0 0.0
    %2071 = vmatprep.subr.mxu0 0.0
    %2072 = vmatpush2.msra.mxu0 0.0
    %2073 = vmatprep.subr.mxu0 0.0
    %2074 = vmatpush2.msra.mxu0 0.0
    %2075 = vmatprep.subr.mxu0 0.0
    %2076 = vmatpush2.msra.mxu0 0.0
    %2077 = vmatprep.subr.mxu0 0.0
    %2078 = vmatpush2.msra.mxu0 0.0
    %2079 = vmatprep.subr.mxu0 0.0
    %2080 = vmatpush2.msra.mxu0 0.0
    %2081 = vmatprep.mubr.f32.mxu0 0.0
    %2082 = vmatmul.mubr.f32.gmra.mxu0 %v2015
    %v2083 = vpop.f32.mrf.mxu0
    %v2084 = vadd.f32 0.0, %v2083
    %v2085 = vpop.f32.mrf.mxu0
    %2086 = vdwg.mxu0
    %v2087 = vadd.f32 %v1847, %v2084
    %2088 = vst.msk [vmem:[#allocation8 + $0x8] sm:$0xff] %vm75, %v2087
    // Predicated region
    $region34: #{tpu_custom_call.1} parent=1 // pred_check
      _
    $region35: #{tpu_custom_call.1} parent=1 // pred_check_branch
      %2090 = sbr.rel (0) target = $region37
    $region36: #{tpu_custom_call.1} parent=1 // pred_region
      %s2092 = ssub.s32 256, 256
      %2093 = vsyncadd [#allocation4], %s2092
      %s2094 = sshll.u32 [#allocation8], 4
      %s2095 = int_to_ptr.vmem [resolvable:$true] %s2094
      %2100 = dma.vmem_to_hbm [thread:$0]  %s2095, 256, %s5, [#allocation4], 128, 128, 8
    $region37: #{tpu_custom_call.1} parent=1 // pred_fallthru
      _
    // Predicated region
    $region38: #{tpu_custom_call.1} parent=1 // pred_check
      _
    $region39: #{tpu_custom_call.1} parent=1 // pred_check_branch
      %2102 = sbr.rel (0) target = $region41
    $region40: #{tpu_custom_call.1} parent=1 // pred_region
      %2103 = dma.done [#allocation4], 256
    $region41: #{tpu_custom_call.1} parent=1 // pred_fallthru
      _
    %2104 = vsyncpa [#allocation3], 1
    %2105 = vsyncpa [#allocation6], 1
    %2106 = vsyncpa [#allocation4], 1

</llo_original>
